<compile_context>
chip_gen: v7x
topology: tpu7x:2x2x1
jax: 0.10.0
libtpu: 0.0.40
codegen_flags: <defaults>
</compile_context>

<pallas_src>
import functools

import jax
import jax.numpy as jnp
from jax.experimental import pallas as pl
from jax.experimental.pallas import tpu as pltpu


_VMEM_LIMIT = 32 * 1024 * 1024  # explicit scoped-VMEM budget; safe on v5e/v6e/v7x


# ------------------- kernel 1: conv (im2col GEMM) + bias + ReLU --------------
def conv_gemm_kernel(p_ref, w_ref, b_ref, o_ref, *, frames_per_block):
    # p_ref: (Fblk, 9*Cin, HW)  w_ref: (Cout, 9*Cin)  b_ref: (Cout, 1)
    # o_ref: (Fblk, Cout, HW)   -- lane-dense along HW (256 lanes).
    w = w_ref[...]
    b = b_ref[...]
    for f in range(frames_per_block):            # static unroll over frames
        y = jnp.dot(w, p_ref[f], preferred_element_type=jnp.float32)  # (Cout, HW)
        o_ref[f] = jnp.maximum(y + b, 0.0).astype(o_ref.dtype)


def conv_relu_pallas(patches, w_lhs, b_col):
    BT, KC, HW = patches.shape
    Cout = w_lhs.shape[0]
    # >= 2 grid steps so the frame axis can shard across v7x's 2 TensorCores;
    # on v5e/v6e the extra step only costs ~0.35 us and blocks stay tiny in VMEM.
    fpb = BT // 2 if BT % 2 == 0 else BT
    grid = BT // fpb
    kernel = functools.partial(conv_gemm_kernel, frames_per_block=fpb)
    return pl.pallas_call(
        kernel,
        out_shape=jax.ShapeDtypeStruct((BT, Cout, HW), jnp.float32),
        grid_spec=pltpu.PrefetchScalarGridSpec(
            num_scalar_prefetch=0,
            grid=(grid,),
            in_specs=[
                pl.BlockSpec((fpb, KC, HW), lambda i: (i, 0, 0)),
                pl.BlockSpec((Cout, KC), lambda i: (0, 0)),
                pl.BlockSpec((Cout, 1), lambda i: (0, 0)),
            ],
            out_specs=pl.BlockSpec((fpb, Cout, HW), lambda i: (i, 0, 0)),
        ),
        compiler_params=pltpu.CompilerParams(
            dimension_semantics=("parallel",),
            vmem_limit_bytes=_VMEM_LIMIT),
    )(patches, w_lhs, b_col)


# ------------------- kernel 2: input projection (hoisted out of recurrence) --
def input_proj_kernel(f_ref, w_ref, b_ref, o_ref):
    # (BT, F) x (F, 4H) + b -> (BT, 4H): one large GEMM instead of T small ones
    # inside the serial loop.
    o_ref[...] = (jnp.dot(f_ref[...], w_ref[...],
                          preferred_element_type=jnp.float32)
                  + b_ref[...]).astype(o_ref.dtype)


def input_proj_pallas(feats, wih, b):
    BT, F = feats.shape
    G = wih.shape[1]
    return pl.pallas_call(
        input_proj_kernel,
        out_shape=jax.ShapeDtypeStruct((BT, G), jnp.float32),
        grid_spec=pltpu.PrefetchScalarGridSpec(
            num_scalar_prefetch=0,
            grid=(1,),
            in_specs=[
                pl.BlockSpec((BT, F), lambda i: (0, 0)),
                pl.BlockSpec((F, G), lambda i: (0, 0)),
                pl.BlockSpec((1, G), lambda i: (0, 0)),
            ],
            out_specs=pl.BlockSpec((BT, G), lambda i: (0, 0)),
        ),
        compiler_params=pltpu.CompilerParams(
            dimension_semantics=("arbitrary",),
            vmem_limit_bytes=_VMEM_LIMIT),
    )(feats, wih, b)


# ------------------- kernel 3: LSTM recurrence + final FC --------------------
def lstm_fc_kernel(gx_ref, whh_ref, fcw_ref, fcb_ref,
                   out_ref, hn_ref, cn_ref, h_scr, c_scr, *, hidden):
    t = pl.program_id(0)

    @pl.when(t == 0)
    def _():
        h_scr[...] = jnp.zeros_like(h_scr)
        c_scr[...] = jnp.zeros_like(c_scr)

    h = h_scr[...]                    # (B, H)
    c = c_scr[...]                    # (B, H)

    # Recurrent part only: x @ W_ih + bias was precomputed in kernel 2.
    gates = gx_ref[0] + jnp.dot(h, whh_ref[...],
                                preferred_element_type=jnp.float32)   # (B, 4H)

    # Whole-tile nonlinearities on the (B, 4H=128) vreg (EUP), then per-gate
    # lane slices only for the elementwise combine.  PyTorch order: i, f, g, o.
    sg = jax.nn.sigmoid(gates)
    th = jnp.tanh(gates)
    i = sg[:, 0 * hidden:1 * hidden]
    f = sg[:, 1 * hidden:2 * hidden]
    g = th[:, 2 * hidden:3 * hidden]
    o = sg[:, 3 * hidden:4 * hidden]

    c_new = f * c + i * g
    h_new = o * jnp.tanh(c_new)
    h_scr[...] = h_new
    c_scr[...] = c_new

    @pl.when(t == pl.num_programs(0) - 1)
    def _():
        hn_ref[...] = h_new.astype(hn_ref.dtype)
        cn_ref[...] = c_new.astype(cn_ref.dtype)
        out_ref[...] = (jnp.dot(h_new, fcw_ref[...],
                                preferred_element_type=jnp.float32)
                        + fcb_ref[...]).astype(out_ref.dtype)


def lstm_fc_pallas(gx_tbg, whh, fcw, fcb, hidden, out_size):
    T, B, G = gx_tbg.shape
    kernel = functools.partial(lstm_fc_kernel, hidden=hidden)
    return pl.pallas_call(
        kernel,
        out_shape=(jax.ShapeDtypeStruct((B, out_size), jnp.float32),
                   jax.ShapeDtypeStruct((B, hidden), jnp.float32),
                   jax.ShapeDtypeStruct((B, hidden), jnp.float32)),
        grid_spec=pltpu.PrefetchScalarGridSpec(
            num_scalar_prefetch=0,
            grid=(T,),
            in_specs=[
                pl.BlockSpec((1, B, G), lambda t: (t, 0, 0)),
                pl.BlockSpec((hidden, G), lambda t: (0, 0)),
                pl.BlockSpec((hidden, out_size), lambda t: (0, 0)),
                pl.BlockSpec((1, out_size), lambda t: (0, 0)),
            ],
            out_specs=(
                pl.BlockSpec((B, out_size), lambda t: (0, 0)),
                pl.BlockSpec((B, hidden), lambda t: (0, 0)),
                pl.BlockSpec((B, hidden), lambda t: (0, 0)),
            ),
            scratch_shapes=[pltpu.VMEM((B, hidden), jnp.float32),
                            pltpu.VMEM((B, hidden), jnp.float32)],
        ),
        compiler_params=pltpu.CompilerParams(
            dimension_semantics=("arbitrary",),
            vmem_limit_bytes=_VMEM_LIMIT),
    )(gx_tbg, whh, fcw, fcb)


# ------------------- forward (glue in plain JAX) -----------------------------
def cnn_lstm_state_forward(x, params):
    B, T, C, H, W = x.shape
    Cout = params["conv_w"].shape[-1]
    hidden = params["whh"].shape[0]
    out_size = params["fcw"].shape[1]
    HW = H * W
    BT = B * T

    # NCHW frames, zero-pad spatial for 3x3 SAME conv (no NHWC transpose).
    xf = x.reshape(BT, C, H, W)
    xp = jnp.pad(xf, ((0, 0), (0, 0), (1, 1), (1, 1)))
    # im2col: (BT, 9, C, H, W) -> (BT, 9*C, HW); offset-major / cin-minor rows,
    # HW on lanes.
    patches = jnp.stack(
        [xp[:, :, dy:dy + H, dx:dx + W] for dy in range(3) for dx in range(3)],
        axis=1).reshape(BT, 9 * C, HW)
    # GEMM lhs (Cout, 9*C) in (co, dy, dx, ci) order, matching patches' rows.
    w_lhs = params["conv_w"].transpose(3, 0, 1, 2).reshape(Cout, 9 * C)
    b_col = params["conv_b"].reshape(Cout, 1)

    conv = conv_relu_pallas(patches, w_lhs, b_col)      # (BT, Cout, HW)
    feats = conv.reshape(BT, Cout * HW)                 # free CHW flatten

    # Input projection + combined LSTM bias for all (b, t) at once.
    gx = input_proj_pallas(feats, params["wih"], params["b"])      # (BT, 4H)
    gx_tbg = gx.reshape(B, T, 4 * hidden).transpose(1, 0, 2)       # tiny (8 KB)

    final_out, hn, cn = lstm_fc_pallas(
        gx_tbg, params["whh"], params["fcw"], params["fcb"], hidden, out_size)

    # Match torch: hidden_state = (h_n, c_n), each (num_layers=1, B, hidden).
    return final_out, (hn[None], cn[None])


# ------------------- pure-JAX reference --------------------------------------
def reference_forward(x, params):
    B, T, C, H, W = x.shape
    Cout = params["conv_w"].shape[-1]
    hidden = params["whh"].shape[0]

    xf = x.reshape(B * T, C, H, W)
    conv = jax.lax.conv_general_dilated(
        xf, params["conv_w"], window_strides=(1, 1), padding="SAME",
        dimension_numbers=("NCHW", "HWIO", "NCHW"))
    conv = jnp.maximum(conv + params["conv_b"].reshape(1, Cout, 1, 1), 0.0)
    feats = conv.reshape(B, T, Cout * H * W).transpose(1, 0, 2)    # (T, B, F)

    def step(carry, xt):
        h, c = carry
        gates = xt @ params["wih"] + h @ params["whh"] + params["b"][0]
        i, f, g, o = jnp.split(gates, 4, axis=-1)
        i, f, o = jax.nn.sigmoid(i), jax.nn.sigmoid(f), jax.nn.sigmoid(o)
        g = jnp.tanh(g)
        c = f * c + i * g
        h = o * jnp.tanh(c)
        return (h, c), None

    init = (jnp.zeros((B, hidden), jnp.float32),
            jnp.zeros((B, hidden), jnp.float32))
    (h, c), _ = jax.lax.scan(step, init, feats)
    out = h @ params["fcw"] + params["fcb"][0]
    return out, (h[None], c[None])


# ------------------- main -----------------------------------------------------
if __name__ == "__main__":
    key = jax.random.PRNGKey(0)
    B, T, C, H, W = 2, 8, 4, 16, 16          # batch, seq, channels, spatial
    CONV_OUT, HIDDEN, OUT = 8, 32, 10        # cnn feature channels, lstm, fc
    F = CONV_OUT * H * W                     # channel-major (C,H,W) flatten

    keys = jax.random.split(key, 8)
    x = jax.random.normal(keys[0], (B, T, C, H, W), jnp.float32)
    params = dict(
        conv_w=0.1 * jax.random.normal(keys[1], (3, 3, C, CONV_OUT), jnp.float32),
        conv_b=0.1 * jax.random.normal(keys[2], (1, CONV_OUT), jnp.float32),
        wih=0.02 * jax.random.normal(keys[3], (F, 4 * HIDDEN), jnp.float32),
        whh=0.1 * jax.random.normal(keys[4], (HIDDEN, 4 * HIDDEN), jnp.float32),
        # combined LSTM bias (b_ih + b_hh)
        b=0.1 * jax.random.normal(keys[5], (1, 4 * HIDDEN), jnp.float32),
        fcw=0.1 * jax.random.normal(keys[6], (HIDDEN, OUT), jnp.float32),
        fcb=0.1 * jax.random.normal(keys[7], (1, OUT), jnp.float32),
    )

    out, (hn, cn) = jax.jit(cnn_lstm_state_forward)(x, params)
    jax.block_until_ready((out, hn, cn))

    ref_out, (ref_hn, ref_cn) = reference_forward(x, params)
    assert out.shape == (B, OUT)
    assert hn.shape == (1, B, HIDDEN) and cn.shape == (1, B, HIDDEN)
    assert jnp.allclose(out, ref_out, atol=1e-4, rtol=1e-4)
    assert jnp.allclose(hn, ref_hn, atol=1e-4, rtol=1e-4)
    assert jnp.allclose(cn, ref_cn, atol=1e-4, rtol=1e-4)
    print("KERNEL_OK")
</pallas_src>

<mosaic_0001>
module attributes {stable_mosaic.version = 11 : i64} {
  func.func @conv_gemm_kernel(%arg0: i32, %arg1: memref<8x36x256xf32, #tpu.memory_space<vmem>>, %arg2: memref<8x36xf32, #tpu.memory_space<vmem>>, %arg3: memref<8x1xf32, #tpu.memory_space<vmem>>, %arg4: memref<8x8x256xf32, #tpu.memory_space<vmem>>) attributes {dimension_semantics = [#tpu.dimension_semantics<parallel>], iteration_bounds = array<i64: 2>, scalar_prefetch = 0 : i64, scratch_operands = 0 : i64, tpu.core_type = #tpu.core_type<tc>, window_params = [{transform_indices = @transform_0, window_bounds = array<i64: 8, 36, 256>}, {pipeline_mode = #tpu.pipeline_mode<synchronous>, transform_indices = @transform_1, window_bounds = array<i64: 8, 36>}, {pipeline_mode = #tpu.pipeline_mode<synchronous>, transform_indices = @transform_2, window_bounds = array<i64: 8, 1>}, {transform_indices = @transform_3, window_bounds = array<i64: 8, 8, 256>}]} {
    %c0 = arith.constant 0 : index
    %c0_0 = arith.constant 0 : index
    %0 = vector.load %arg2[%c0, %c0_0] : memref<8x36xf32, #tpu.memory_space<vmem>>, vector<8x36xf32>
    %c0_1 = arith.constant 0 : index
    %c0_2 = arith.constant 0 : index
    %1 = vector.load %arg3[%c0_1, %c0_2] : memref<8x1xf32, #tpu.memory_space<vmem>>, vector<8x1xf32>
    %c0_3 = arith.constant 0 : index
    %c0_4 = arith.constant 0 : index
    %c0_5 = arith.constant 0 : index
    %2 = vector.load %arg1[%c0_3, %c0_4, %c0_5] : memref<8x36x256xf32, #tpu.memory_space<vmem>>, vector<1x36x256xf32>
    %3 = vector.shape_cast %2 : vector<1x36x256xf32> to vector<36x256xf32>
    %cst = arith.constant dense<0.000000e+00> : vector<8x256xf32>
    %4 = tpu.matmul %0, %3, %cst {dimension_numbers = #tpu.dot_dimension_numbers<[1], [0], [0], [1], [0, 0, 1, 1], [], []>} : vector<8x36xf32>, vector<36x256xf32>, vector<8x256xf32> -> vector<8x256xf32>
    %5 = vector.broadcast %1 : vector<8x1xf32> to vector<8x256xf32>
    %6 = arith.addf %4, %5 : vector<8x256xf32>
    %cst_6 = arith.constant 0.000000e+00 : f32
    %7 = vector.broadcast %cst_6 : f32 to vector<8x256xf32>
    %8 = arith.maximumf %6, %7 : vector<8x256xf32>
    %c0_7 = arith.constant 0 : index
    %c0_8 = arith.constant 0 : index
    %c0_9 = arith.constant 0 : index
    %9 = vector.load %arg4[%c0_7, %c0_8, %c0_9] : memref<8x8x256xf32, #tpu.memory_space<vmem>>, vector<1x8x256xf32>
    %10 = vector.shape_cast %9 : vector<1x8x256xf32> to vector<8x256xf32>
    %11 = vector.shape_cast %8 : vector<8x256xf32> to vector<1x8x256xf32>
    tpu.vector_store %arg4[%c0_7, %c0_8, %c0_9], %11 {strides = array<i32>} : memref<8x8x256xf32, #tpu.memory_space<vmem>>, vector<1x8x256xf32>,
    %c1 = arith.constant 1 : index
    %c0_10 = arith.constant 0 : index
    %c0_11 = arith.constant 0 : index
    %12 = vector.load %arg1[%c1, %c0_10, %c0_11] : memref<8x36x256xf32, #tpu.memory_space<vmem>>, vector<1x36x256xf32>
    %13 = vector.shape_cast %12 : vector<1x36x256xf32> to vector<36x256xf32>
    %cst_12 = arith.constant dense<0.000000e+00> : vector<8x256xf32>
    %14 = tpu.matmul %0, %13, %cst_12 {dimension_numbers = #tpu.dot_dimension_numbers<[1], [0], [0], [1], [0, 0, 1, 1], [], []>} : vector<8x36xf32>, vector<36x256xf32>, vector<8x256xf32> -> vector<8x256xf32>
    %15 = vector.broadcast %1 : vector<8x1xf32> to vector<8x256xf32>
    %16 = arith.addf %14, %15 : vector<8x256xf32>
    %cst_13 = arith.constant 0.000000e+00 : f32
    %17 = vector.broadcast %cst_13 : f32 to vector<8x256xf32>
    %18 = arith.maximumf %16, %17 : vector<8x256xf32>
    %c1_14 = arith.constant 1 : index
    %c0_15 = arith.constant 0 : index
    %c0_16 = arith.constant 0 : index
    %19 = vector.load %arg4[%c1_14, %c0_15, %c0_16] : memref<8x8x256xf32, #tpu.memory_space<vmem>>, vector<1x8x256xf32>
    %20 = vector.shape_cast %19 : vector<1x8x256xf32> to vector<8x256xf32>
    %21 = vector.shape_cast %18 : vector<8x256xf32> to vector<1x8x256xf32>
    tpu.vector_store %arg4[%c1_14, %c0_15, %c0_16], %21 {strides = array<i32>} : memref<8x8x256xf32, #tpu.memory_space<vmem>>, vector<1x8x256xf32>,
    %c2 = arith.constant 2 : index
    %c0_17 = arith.constant 0 : index
    %c0_18 = arith.constant 0 : index
    %22 = vector.load %arg1[%c2, %c0_17, %c0_18] : memref<8x36x256xf32, #tpu.memory_space<vmem>>, vector<1x36x256xf32>
    %23 = vector.shape_cast %22 : vector<1x36x256xf32> to vector<36x256xf32>
    %cst_19 = arith.constant dense<0.000000e+00> : vector<8x256xf32>
    %24 = tpu.matmul %0, %23, %cst_19 {dimension_numbers = #tpu.dot_dimension_numbers<[1], [0], [0], [1], [0, 0, 1, 1], [], []>} : vector<8x36xf32>, vector<36x256xf32>, vector<8x256xf32> -> vector<8x256xf32>
    %25 = vector.broadcast %1 : vector<8x1xf32> to vector<8x256xf32>
    %26 = arith.addf %24, %25 : vector<8x256xf32>
    %cst_20 = arith.constant 0.000000e+00 : f32
    %27 = vector.broadcast %cst_20 : f32 to vector<8x256xf32>
    %28 = arith.maximumf %26, %27 : vector<8x256xf32>
    %c2_21 = arith.constant 2 : index
    %c0_22 = arith.constant 0 : index
    %c0_23 = arith.constant 0 : index
    %29 = vector.load %arg4[%c2_21, %c0_22, %c0_23] : memref<8x8x256xf32, #tpu.memory_space<vmem>>, vector<1x8x256xf32>
    %30 = vector.shape_cast %29 : vector<1x8x256xf32> to vector<8x256xf32>
    %31 = vector.shape_cast %28 : vector<8x256xf32> to vector<1x8x256xf32>
    tpu.vector_store %arg4[%c2_21, %c0_22, %c0_23], %31 {strides = array<i32>} : memref<8x8x256xf32, #tpu.memory_space<vmem>>, vector<1x8x256xf32>,
    %c3 = arith.constant 3 : index
    %c0_24 = arith.constant 0 : index
    %c0_25 = arith.constant 0 : index
    %32 = vector.load %arg1[%c3, %c0_24, %c0_25] : memref<8x36x256xf32, #tpu.memory_space<vmem>>, vector<1x36x256xf32>
    %33 = vector.shape_cast %32 : vector<1x36x256xf32> to vector<36x256xf32>
    %cst_26 = arith.constant dense<0.000000e+00> : vector<8x256xf32>
    %34 = tpu.matmul %0, %33, %cst_26 {dimension_numbers = #tpu.dot_dimension_numbers<[1], [0], [0], [1], [0, 0, 1, 1], [], []>} : vector<8x36xf32>, vector<36x256xf32>, vector<8x256xf32> -> vector<8x256xf32>
    %35 = vector.broadcast %1 : vector<8x1xf32> to vector<8x256xf32>
    %36 = arith.addf %34, %35 : vector<8x256xf32>
    %cst_27 = arith.constant 0.000000e+00 : f32
    %37 = vector.broadcast %cst_27 : f32 to vector<8x256xf32>
    %38 = arith.maximumf %36, %37 : vector<8x256xf32>
    %c3_28 = arith.constant 3 : index
    %c0_29 = arith.constant 0 : index
    %c0_30 = arith.constant 0 : index
    %39 = vector.load %arg4[%c3_28, %c0_29, %c0_30] : memref<8x8x256xf32, #tpu.memory_space<vmem>>, vector<1x8x256xf32>
    %40 = vector.shape_cast %39 : vector<1x8x256xf32> to vector<8x256xf32>
    %41 = vector.shape_cast %38 : vector<8x256xf32> to vector<1x8x256xf32>
    tpu.vector_store %arg4[%c3_28, %c0_29, %c0_30], %41 {strides = array<i32>} : memref<8x8x256xf32, #tpu.memory_space<vmem>>, vector<1x8x256xf32>,
    %c4 = arith.constant 4 : index
    %c0_31 = arith.constant 0 : index
    %c0_32 = arith.constant 0 : index
    %42 = vector.load %arg1[%c4, %c0_31, %c0_32] : memref<8x36x256xf32, #tpu.memory_space<vmem>>, vector<1x36x256xf32>
    %43 = vector.shape_cast %42 : vector<1x36x256xf32> to vector<36x256xf32>
    %cst_33 = arith.constant dense<0.000000e+00> : vector<8x256xf32>
    %44 = tpu.matmul %0, %43, %cst_33 {dimension_numbers = #tpu.dot_dimension_numbers<[1], [0], [0], [1], [0, 0, 1, 1], [], []>} : vector<8x36xf32>, vector<36x256xf32>, vector<8x256xf32> -> vector<8x256xf32>
    %45 = vector.broadcast %1 : vector<8x1xf32> to vector<8x256xf32>
    %46 = arith.addf %44, %45 : vector<8x256xf32>
    %cst_34 = arith.constant 0.000000e+00 : f32
    %47 = vector.broadcast %cst_34 : f32 to vector<8x256xf32>
    %48 = arith.maximumf %46, %47 : vector<8x256xf32>
    %c4_35 = arith.constant 4 : index
    %c0_36 = arith.constant 0 : index
    %c0_37 = arith.constant 0 : index
    %49 = vector.load %arg4[%c4_35, %c0_36, %c0_37] : memref<8x8x256xf32, #tpu.memory_space<vmem>>, vector<1x8x256xf32>
    %50 = vector.shape_cast %49 : vector<1x8x256xf32> to vector<8x256xf32>
    %51 = vector.shape_cast %48 : vector<8x256xf32> to vector<1x8x256xf32>
    tpu.vector_store %arg4[%c4_35, %c0_36, %c0_37], %51 {strides = array<i32>} : memref<8x8x256xf32, #tpu.memory_space<vmem>>, vector<1x8x256xf32>,
    %c5 = arith.constant 5 : index
    %c0_38 = arith.constant 0 : index
    %c0_39 = arith.constant 0 : index
    %52 = vector.load %arg1[%c5, %c0_38, %c0_39] : memref<8x36x256xf32, #tpu.memory_space<vmem>>, vector<1x36x256xf32>
    %53 = vector.shape_cast %52 : vector<1x36x256xf32> to vector<36x256xf32>
    %cst_40 = arith.constant dense<0.000000e+00> : vector<8x256xf32>
    %54 = tpu.matmul %0, %53, %cst_40 {dimension_numbers = #tpu.dot_dimension_numbers<[1], [0], [0], [1], [0, 0, 1, 1], [], []>} : vector<8x36xf32>, vector<36x256xf32>, vector<8x256xf32> -> vector<8x256xf32>
    %55 = vector.broadcast %1 : vector<8x1xf32> to vector<8x256xf32>
    %56 = arith.addf %54, %55 : vector<8x256xf32>
    %cst_41 = arith.constant 0.000000e+00 : f32
    %57 = vector.broadcast %cst_41 : f32 to vector<8x256xf32>
    %58 = arith.maximumf %56, %57 : vector<8x256xf32>
    %c5_42 = arith.constant 5 : index
    %c0_43 = arith.constant 0 : index
    %c0_44 = arith.constant 0 : index
    %59 = vector.load %arg4[%c5_42, %c0_43, %c0_44] : memref<8x8x256xf32, #tpu.memory_space<vmem>>, vector<1x8x256xf32>
    %60 = vector.shape_cast %59 : vector<1x8x256xf32> to vector<8x256xf32>
    %61 = vector.shape_cast %58 : vector<8x256xf32> to vector<1x8x256xf32>
    tpu.vector_store %arg4[%c5_42, %c0_43, %c0_44], %61 {strides = array<i32>} : memref<8x8x256xf32, #tpu.memory_space<vmem>>, vector<1x8x256xf32>,
    %c6 = arith.constant 6 : index
    %c0_45 = arith.constant 0 : index
    %c0_46 = arith.constant 0 : index
    %62 = vector.load %arg1[%c6, %c0_45, %c0_46] : memref<8x36x256xf32, #tpu.memory_space<vmem>>, vector<1x36x256xf32>
    %63 = vector.shape_cast %62 : vector<1x36x256xf32> to vector<36x256xf32>
    %cst_47 = arith.constant dense<0.000000e+00> : vector<8x256xf32>
    %64 = tpu.matmul %0, %63, %cst_47 {dimension_numbers = #tpu.dot_dimension_numbers<[1], [0], [0], [1], [0, 0, 1, 1], [], []>} : vector<8x36xf32>, vector<36x256xf32>, vector<8x256xf32> -> vector<8x256xf32>
    %65 = vector.broadcast %1 : vector<8x1xf32> to vector<8x256xf32>
    %66 = arith.addf %64, %65 : vector<8x256xf32>
    %cst_48 = arith.constant 0.000000e+00 : f32
    %67 = vector.broadcast %cst_48 : f32 to vector<8x256xf32>
    %68 = arith.maximumf %66, %67 : vector<8x256xf32>
    %c6_49 = arith.constant 6 : index
    %c0_50 = arith.constant 0 : index
    %c0_51 = arith.constant 0 : index
    %69 = vector.load %arg4[%c6_49, %c0_50, %c0_51] : memref<8x8x256xf32, #tpu.memory_space<vmem>>, vector<1x8x256xf32>
    %70 = vector.shape_cast %69 : vector<1x8x256xf32> to vector<8x256xf32>
    %71 = vector.shape_cast %68 : vector<8x256xf32> to vector<1x8x256xf32>
    tpu.vector_store %arg4[%c6_49, %c0_50, %c0_51], %71 {strides = array<i32>} : memref<8x8x256xf32, #tpu.memory_space<vmem>>, vector<1x8x256xf32>,
    %c7 = arith.constant 7 : index
    %c0_52 = arith.constant 0 : index
    %c0_53 = arith.constant 0 : index
    %72 = vector.load %arg1[%c7, %c0_52, %c0_53] : memref<8x36x256xf32, #tpu.memory_space<vmem>>, vector<1x36x256xf32>
    %73 = vector.shape_cast %72 : vector<1x36x256xf32> to vector<36x256xf32>
    %cst_54 = arith.constant dense<0.000000e+00> : vector<8x256xf32>
    %74 = tpu.matmul %0, %73, %cst_54 {dimension_numbers = #tpu.dot_dimension_numbers<[1], [0], [0], [1], [0, 0, 1, 1], [], []>} : vector<8x36xf32>, vector<36x256xf32>, vector<8x256xf32> -> vector<8x256xf32>
    %75 = vector.broadcast %1 : vector<8x1xf32> to vector<8x256xf32>
    %76 = arith.addf %74, %75 : vector<8x256xf32>
    %cst_55 = arith.constant 0.000000e+00 : f32
    %77 = vector.broadcast %cst_55 : f32 to vector<8x256xf32>
    %78 = arith.maximumf %76, %77 : vector<8x256xf32>
    %c7_56 = arith.constant 7 : index
    %c0_57 = arith.constant 0 : index
    %c0_58 = arith.constant 0 : index
    %79 = vector.load %arg4[%c7_56, %c0_57, %c0_58] : memref<8x8x256xf32, #tpu.memory_space<vmem>>, vector<1x8x256xf32>
    %80 = vector.shape_cast %79 : vector<1x8x256xf32> to vector<8x256xf32>
    %81 = vector.shape_cast %78 : vector<8x256xf32> to vector<1x8x256xf32>
    tpu.vector_store %arg4[%c7_56, %c0_57, %c0_58], %81 {strides = array<i32>} : memref<8x8x256xf32, #tpu.memory_space<vmem>>, vector<1x8x256xf32>,
    return
  }
  func.func @transform_0(%arg0: i32) -> (i32, i32, i32) {
    %c0_i32 = arith.constant 0 : i32
    %c0_i32_0 = arith.constant 0 : i32
    %c0_i32_1 = arith.constant 0 : i32
    return %arg0, %c0_i32, %c0_i32_0 : i32, i32, i32
  }
  func.func @transform_1(%arg0: i32) -> (i32, i32) {
    %c0_i32 = arith.constant 0 : i32
    %c0_i32_0 = arith.constant 0 : i32
    %c0_i32_1 = arith.constant 0 : i32
    return %c0_i32, %c0_i32_0 : i32, i32
  }
  func.func @transform_2(%arg0: i32) -> (i32, i32) {
    %c0_i32 = arith.constant 0 : i32
    %c0_i32_0 = arith.constant 0 : i32
    %c0_i32_1 = arith.constant 0 : i32
    return %c0_i32, %c0_i32_0 : i32, i32
  }
  func.func @transform_3(%arg0: i32) -> (i32, i32, i32) {
    %c0_i32 = arith.constant 0 : i32
    %c0_i32_0 = arith.constant 0 : i32
    %c0_i32_1 = arith.constant 0 : i32
    return %arg0, %c0_i32, %c0_i32_0 : i32, i32, i32
  }
}

module attributes {stable_mosaic.version = 11 : i64} {
  func.func @input_proj_kernel(%arg0: i32, %arg1: memref<16x2048xf32, #tpu.memory_space<vmem>>, %arg2: memref<2048x128xf32, #tpu.memory_space<vmem>>, %arg3: memref<1x128xf32, #tpu.memory_space<vmem>>, %arg4: memref<16x128xf32, #tpu.memory_space<vmem>>) attributes {dimension_semantics = [#tpu.dimension_semantics<arbitrary>], iteration_bounds = array<i64: 1>, scalar_prefetch = 0 : i64, scratch_operands = 0 : i64, tpu.core_type = #tpu.core_type<tc>, window_params = [{pipeline_mode = #tpu.pipeline_mode<synchronous>, transform_indices = @transform_0, window_bounds = array<i64: 16, 2048>}, {pipeline_mode = #tpu.pipeline_mode<synchronous>, transform_indices = @transform_1, window_bounds = array<i64: 2048, 128>}, {pipeline_mode = #tpu.pipeline_mode<synchronous>, transform_indices = @transform_2, window_bounds = array<i64: 1, 128>}, {pipeline_mode = #tpu.pipeline_mode<synchronous>, transform_indices = @transform_3, window_bounds = array<i64: 16, 128>}]} {
    %c0 = arith.constant 0 : index
    %c0_0 = arith.constant 0 : index
    %0 = vector.load %arg1[%c0, %c0_0] : memref<16x2048xf32, #tpu.memory_space<vmem>>, vector<16x2048xf32>
    %c0_1 = arith.constant 0 : index
    %c0_2 = arith.constant 0 : index
    %1 = vector.load %arg2[%c0_1, %c0_2] : memref<2048x128xf32, #tpu.memory_space<vmem>>, vector<2048x128xf32>
    %cst = arith.constant dense<0.000000e+00> : vector<16x128xf32>
    %2 = tpu.matmul %0, %1, %cst {dimension_numbers = #tpu.dot_dimension_numbers<[1], [0], [0], [1], [0, 0, 1, 1], [], []>} : vector<16x2048xf32>, vector<2048x128xf32>, vector<16x128xf32> -> vector<16x128xf32>
    %c0_3 = arith.constant 0 : index
    %c0_4 = arith.constant 0 : index
    %3 = vector.load %arg3[%c0_3, %c0_4] : memref<1x128xf32, #tpu.memory_space<vmem>>, vector<1x128xf32>
    %4 = vector.broadcast %3 : vector<1x128xf32> to vector<16x128xf32>
    %5 = arith.addf %2, %4 : vector<16x128xf32>
    %c0_5 = arith.constant 0 : index
    %c0_6 = arith.constant 0 : index
    %6 = vector.load %arg4[%c0_5, %c0_6] : memref<16x128xf32, #tpu.memory_space<vmem>>, vector<16x128xf32>
    tpu.vector_store %arg4[%c0_5, %c0_6], %5 {strides = array<i32>} : memref<16x128xf32, #tpu.memory_space<vmem>>, vector<16x128xf32>,
    return
  }
  func.func @transform_0(%arg0: i32) -> (i32, i32) {
    %c0_i32 = arith.constant 0 : i32
    %c0_i32_0 = arith.constant 0 : i32
    %c0_i32_1 = arith.constant 0 : i32
    return %c0_i32, %c0_i32_0 : i32, i32
  }
  func.func @transform_1(%arg0: i32) -> (i32, i32) {
    %c0_i32 = arith.constant 0 : i32
    %c0_i32_0 = arith.constant 0 : i32
    %c0_i32_1 = arith.constant 0 : i32
    return %c0_i32, %c0_i32_0 : i32, i32
  }
  func.func @transform_2(%arg0: i32) -> (i32, i32) {
    %c0_i32 = arith.constant 0 : i32
    %c0_i32_0 = arith.constant 0 : i32
    %c0_i32_1 = arith.constant 0 : i32
    return %c0_i32, %c0_i32_0 : i32, i32
  }
  func.func @transform_3(%arg0: i32) -> (i32, i32) {
    %c0_i32 = arith.constant 0 : i32
    %c0_i32_0 = arith.constant 0 : i32
    %c0_i32_1 = arith.constant 0 : i32
    return %c0_i32, %c0_i32_0 : i32, i32
  }
}

module attributes {stable_mosaic.version = 11 : i64} {
  func.func @lstm_fc_kernel(%arg0: i32, %arg1: memref<1x2x128xf32, #tpu.memory_space<vmem>>, %arg2: memref<32x128xf32, #tpu.memory_space<vmem>>, %arg3: memref<32x10xf32, #tpu.memory_space<vmem>>, %arg4: memref<1x10xf32, #tpu.memory_space<vmem>>, %arg5: memref<2x10xf32, #tpu.memory_space<vmem>>, %arg6: memref<2x32xf32, #tpu.memory_space<vmem>>, %arg7: memref<2x32xf32, #tpu.memory_space<vmem>>, %arg8: memref<2x32xf32, #tpu.memory_space<vmem>>, %arg9: memref<2x32xf32, #tpu.memory_space<vmem>>) attributes {dimension_semantics = [#tpu.dimension_semantics<arbitrary>], iteration_bounds = array<i64: 8>, scalar_prefetch = 0 : i64, scratch_operands = 2 : i64, tpu.core_type = #tpu.core_type<tc>, window_params = [{transform_indices = @transform_0, window_bounds = array<i64: 1, 2, 128>}, {pipeline_mode = #tpu.pipeline_mode<synchronous>, transform_indices = @transform_1, window_bounds = array<i64: 32, 128>}, {pipeline_mode = #tpu.pipeline_mode<synchronous>, transform_indices = @transform_2, window_bounds = array<i64: 32, 10>}, {pipeline_mode = #tpu.pipeline_mode<synchronous>, transform_indices = @transform_3, window_bounds = array<i64: 1, 10>}, {pipeline_mode = #tpu.pipeline_mode<synchronous>, transform_indices = @transform_4, window_bounds = array<i64: 2, 10>}, {pipeline_mode = #tpu.pipeline_mode<synchronous>, transform_indices = @transform_5, window_bounds = array<i64: 2, 32>}, {pipeline_mode = #tpu.pipeline_mode<synchronous>, transform_indices = @transform_6, window_bounds = array<i64: 2, 32>}]} {
    %c0_i32 = arith.constant 0 : i32
    %0 = arith.cmpi eq, %arg0, %c0_i32 : i32
    %1 = arith.extui %0 : i1 to i32
    %c0_i32_0 = arith.constant 0 : i32
    %2 = arith.cmpi ne, %1, %c0_i32_0 : i32
    scf.if %2 {
      %cst_15 = arith.constant 0.000000e+00 : f32
      %30 = vector.broadcast %cst_15 : f32 to vector<2x32xf32>
      %c0_16 = arith.constant 0 : index
      %c0_17 = arith.constant 0 : index
      %31 = vector.load %arg8[%c0_16, %c0_17] : memref<2x32xf32, #tpu.memory_space<vmem>>, vector<2x32xf32>
      tpu.vector_store %arg8[%c0_16, %c0_17], %30 {strides = array<i32>} : memref<2x32xf32, #tpu.memory_space<vmem>>, vector<2x32xf32>,
      %cst_18 = arith.constant 0.000000e+00 : f32
      %32 = vector.broadcast %cst_18 : f32 to vector<2x32xf32>
      %c0_19 = arith.constant 0 : index
      %c0_20 = arith.constant 0 : index
      %33 = vector.load %arg9[%c0_19, %c0_20] : memref<2x32xf32, #tpu.memory_space<vmem>>, vector<2x32xf32>
      tpu.vector_store %arg9[%c0_19, %c0_20], %32 {strides = array<i32>} : memref<2x32xf32, #tpu.memory_space<vmem>>, vector<2x32xf32>,
    } else {
    }
    %c0 = arith.constant 0 : index
    %c0_1 = arith.constant 0 : index
    %3 = vector.load %arg8[%c0, %c0_1] : memref<2x32xf32, #tpu.memory_space<vmem>>, vector<2x32xf32>
    %c0_2 = arith.constant 0 : index
    %c0_3 = arith.constant 0 : index
    %4 = vector.load %arg9[%c0_2, %c0_3] : memref<2x32xf32, #tpu.memory_space<vmem>>, vector<2x32xf32>
    %c0_4 = arith.constant 0 : index
    %c0_5 = arith.constant 0 : index
    %c0_6 = arith.constant 0 : index
    %5 = vector.load %arg1[%c0_4, %c0_5, %c0_6] : memref<1x2x128xf32, #tpu.memory_space<vmem>>, vector<1x2x128xf32>
    %6 = vector.shape_cast %5 : vector<1x2x128xf32> to vector<2x128xf32>
    %c0_7 = arith.constant 0 : index
    %c0_8 = arith.constant 0 : index
    %7 = vector.load %arg2[%c0_7, %c0_8] : memref<32x128xf32, #tpu.memory_space<vmem>>, vector<32x128xf32>
    %cst = arith.constant dense<0.000000e+00> : vector<2x128xf32>
    %8 = tpu.matmul %3, %7, %cst {dimension_numbers = #tpu.dot_dimension_numbers<[1], [0], [0], [1], [0, 0, 1, 1], [], []>} : vector<2x32xf32>, vector<32x128xf32>, vector<2x128xf32> -> vector<2x128xf32>
    %9 = arith.addf %6, %8 : vector<2x128xf32>
    %10 = arith.negf %9 : vector<2x128xf32>
    %11 = math.exp %10 : vector<2x128xf32>
    %cst_9 = arith.constant 1.000000e+00 : f32
    %12 = vector.broadcast %cst_9 : f32 to vector<2x128xf32>
    %13 = arith.addf %12, %11 : vector<2x128xf32>
    %14 = arith.divf %12, %13 : vector<2x128xf32>
    %15 = math.tanh %9 : vector<2x128xf32>
    %16 = vector.extract_strided_slice %14 {offsets = [0, 0], sizes = [2, 32], strides = [1, 1]} : vector<2x128xf32> to vector<2x32xf32>
    %17 = vector.extract_strided_slice %14 {offsets = [0, 32], sizes = [2, 32], strides = [1, 1]} : vector<2x128xf32> to vector<2x32xf32>
    %18 = vector.extract_strided_slice %15 {offsets = [0, 64], sizes = [2, 32], strides = [1, 1]} : vector<2x128xf32> to vector<2x32xf32>
    %19 = vector.extract_strided_slice %14 {offsets = [0, 96], sizes = [2, 32], strides = [1, 1]} : vector<2x128xf32> to vector<2x32xf32>
    %20 = arith.mulf %17, %4 : vector<2x32xf32>
    %21 = arith.mulf %16, %18 : vector<2x32xf32>
    %22 = arith.addf %20, %21 : vector<2x32xf32>
    %23 = math.tanh %22 : vector<2x32xf32>
    %24 = arith.mulf %19, %23 : vector<2x32xf32>
    %c0_10 = arith.constant 0 : index
    %c0_11 = arith.constant 0 : index
    %25 = vector.load %arg8[%c0_10, %c0_11] : memref<2x32xf32, #tpu.memory_space<vmem>>, vector<2x32xf32>
    tpu.vector_store %arg8[%c0_10, %c0_11], %24 {strides = array<i32>} : memref<2x32xf32, #tpu.memory_space<vmem>>, vector<2x32xf32>,
    %c0_12 = arith.constant 0 : index
    %c0_13 = arith.constant 0 : index
    %26 = vector.load %arg9[%c0_12, %c0_13] : memref<2x32xf32, #tpu.memory_space<vmem>>, vector<2x32xf32>
    tpu.vector_store %arg9[%c0_12, %c0_13], %22 {strides = array<i32>} : memref<2x32xf32, #tpu.memory_space<vmem>>, vector<2x32xf32>,
    %c7_i32 = arith.constant 7 : i32
    %27 = arith.cmpi eq, %arg0, %c7_i32 : i32
    %28 = arith.extui %27 : i1 to i32
    %c0_i32_14 = arith.constant 0 : i32
    %29 = arith.cmpi ne, %28, %c0_i32_14 : i32
    scf.if %29 {
      %c0_15 = arith.constant 0 : index
      %c0_16 = arith.constant 0 : index
      %30 = vector.load %arg6[%c0_15, %c0_16] : memref<2x32xf32, #tpu.memory_space<vmem>>, vector<2x32xf32>
      tpu.vector_store %arg6[%c0_15, %c0_16], %24 {strides = array<i32>} : memref<2x32xf32, #tpu.memory_space<vmem>>, vector<2x32xf32>,
      %c0_17 = arith.constant 0 : index
      %c0_18 = arith.constant 0 : index
      %31 = vector.load %arg7[%c0_17, %c0_18] : memref<2x32xf32, #tpu.memory_space<vmem>>, vector<2x32xf32>
      tpu.vector_store %arg7[%c0_17, %c0_18], %22 {strides = array<i32>} : memref<2x32xf32, #tpu.memory_space<vmem>>, vector<2x32xf32>,
      %c0_19 = arith.constant 0 : index
      %c0_20 = arith.constant 0 : index
      %32 = vector.load %arg3[%c0_19, %c0_20] : memref<32x10xf32, #tpu.memory_space<vmem>>, vector<32x10xf32>
      %cst_21 = arith.constant dense<0.000000e+00> : vector<2x10xf32>
      %33 = tpu.matmul %24, %32, %cst_21 {dimension_numbers = #tpu.dot_dimension_numbers<[1], [0], [0], [1], [0, 0, 1, 1], [], []>} : vector<2x32xf32>, vector<32x10xf32>, vector<2x10xf32> -> vector<2x10xf32>
      %c0_22 = arith.constant 0 : index
      %c0_23 = arith.constant 0 : index
      %34 = vector.load %arg4[%c0_22, %c0_23] : memref<1x10xf32, #tpu.memory_space<vmem>>, vector<1x10xf32>
      %35 = vector.broadcast %34 : vector<1x10xf32> to vector<2x10xf32>
      %36 = arith.addf %33, %35 : vector<2x10xf32>
      %c0_24 = arith.constant 0 : index
      %c0_25 = arith.constant 0 : index
      %37 = vector.load %arg5[%c0_24, %c0_25] : memref<2x10xf32, #tpu.memory_space<vmem>>, vector<2x10xf32>
      tpu.vector_store %arg5[%c0_24, %c0_25], %36 {strides = array<i32>} : memref<2x10xf32, #tpu.memory_space<vmem>>, vector<2x10xf32>,
    } else {
    }
    return
  }
  func.func @transform_0(%arg0: i32) -> (i32, i32, i32) {
    %c0_i32 = arith.constant 0 : i32
    %c0_i32_0 = arith.constant 0 : i32
    %c0_i32_1 = arith.constant 0 : i32
    return %arg0, %c0_i32, %c0_i32_0 : i32, i32, i32
  }
  func.func @transform_1(%arg0: i32) -> (i32, i32) {
    %c0_i32 = arith.constant 0 : i32
    %c0_i32_0 = arith.constant 0 : i32
    %c0_i32_1 = arith.constant 0 : i32
    return %c0_i32, %c0_i32_0 : i32, i32
  }
  func.func @transform_2(%arg0: i32) -> (i32, i32) {
    %c0_i32 = arith.constant 0 : i32
    %c0_i32_0 = arith.constant 0 : i32
    %c0_i32_1 = arith.constant 0 : i32
    return %c0_i32, %c0_i32_0 : i32, i32
  }
  func.func @transform_3(%arg0: i32) -> (i32, i32) {
    %c0_i32 = arith.constant 0 : i32
    %c0_i32_0 = arith.constant 0 : i32
    %c0_i32_1 = arith.constant 0 : i32
    return %c0_i32, %c0_i32_0 : i32, i32
  }
  func.func @transform_4(%arg0: i32) -> (i32, i32) {
    %c0_i32 = arith.constant 0 : i32
    %c0_i32_0 = arith.constant 0 : i32
    %c0_i32_1 = arith.constant 0 : i32
    return %c0_i32, %c0_i32_0 : i32, i32
  }
  func.func @transform_5(%arg0: i32) -> (i32, i32) {
    %c0_i32 = arith.constant 0 : i32
    %c0_i32_0 = arith.constant 0 : i32
    %c0_i32_1 = arith.constant 0 : i32
    return %c0_i32, %c0_i32_0 : i32, i32
  }
  func.func @transform_6(%arg0: i32) -> (i32, i32) {
    %c0_i32 = arith.constant 0 : i32
    %c0_i32_0 = arith.constant 0 : i32
    %c0_i32_1 = arith.constant 0 : i32
    return %c0_i32, %c0_i32_0 : i32, i32
  }
}

</mosaic_0001>

<llo_original>
// kernel: cnn_lstm_state_forward.3
$region0: #{cnn_lstm_state_forward.3}
  #allocation0 [shape = 'u32[]', space=smem, size = 0x4, offset = 0x4, fixed_abs, tag = 'smem constant byte address 0x4 - core index']
  #allocation1 [shape = 'u32[144,128]{1,0:T(1,128)}', space=vmem, size = 0x12000, scoped, tag = 'internal scratch']
  %s0 = inlined_call_operand.vmem [shape: f32[16,36,256], index: 0, kind: input, shape index: {}]
  %s1 = inlined_call_operand.vmem [shape: f32[8,36], index: 1, kind: input, shape index: {}]
  %s2 = inlined_call_operand.vmem [shape: f32[8,1], index: 2, kind: input, shape index: {}]
  %s3 = inlined_call_operand.vmem [shape: f32[16,8,256], index: 3, kind: output, shape index: {}]
  %s4 = sld [smem:[#allocation0]]
  $region45: #{cnn_lstm_state_forward.3} parent=0
    _
  %s6 = ssub.s32 1, %s4
  %s7 = scalar_select 0, %s6, %s4
  loop: start=0, step=1, limit=4
  $region2: #{cnn_lstm_state_forward.3} parent=0 // loop_pre_header
    _
  $region3: #{cnn_lstm_state_forward.3} parent=0 // loop_header
    %s9 = sphi 0, %s13
    %p10 = scmp.ge.s32.totalorder %s9, 4
    %s19 = sphi 0, %s21
    %s22 = sphi 0, %s19
    %s23 = sphi 0, %s22
    %s39 = sphi 0, %s23
    %s43 = sphi 0, %s43
    %s45 = sphi 0, %s43
    %s46 = sphi 0, %s45
    %s60 = sphi 0, %s46
    %s64 = sphi 0, %s64
    %s66 = sphi 0, %s64
    %s67 = sphi 0, %s66
    %s81 = sphi 0, %s67
    %s87 = sphi 0, %s89
    %s90 = sphi 0, %s87
    %s91 = sphi 0, %s90
    %s107 = sphi 0, %s91
  $region4: #{cnn_lstm_state_forward.3} parent=0 // loop_header_branch
    %12 = sbr.rel (%p10) target = $region8
  $region5: #{cnn_lstm_state_forward.3} parent=0 // loop_body
    %s14 = ssub.s32 %s9, 1
    %s15 = ssub.s32 %s9, 2
    %s16 = sadd.s32 %s9, 1
    %s17 = ssub.s32 %s9, %s16
    %p18 = scmp.eq.s32.totalorder %s17, 0
    %s20 = sadd.s32 %s19, 1
    %s21 = scalar_select %p18, %s19, %s20
    %p24 = pneg %p18
    %p25 = scmp.eq.s32.totalorder %s9, 1
    %p26 = por %p24, %p25
    %p27 = scmp.ne.s32.totalorder %s19, %s22
    %p28 = scmp.eq.s32.totalorder %s9, 0
    %p29 = por %p27, %p28
    %p30 = scmp.ne.s32.totalorder %s19, %s22
    %p31 = scmp.eq.s32.totalorder %s14, 1
    %p32 = por %p30, %p31
    %p33 = scmp.ne.s32.totalorder %s22, %s23
    %p34 = scmp.eq.s32.totalorder %s14, 0
    %p35 = por %p33, %p34
    %p36 = scmp.ne.s32.totalorder %s22, %s23
    %p37 = scmp.eq.s32.totalorder %s15, 1
    %p38 = por %p36, %p37
    %p40 = scmp.ne.s32.totalorder %s23, %s39
    %p41 = scmp.eq.s32.totalorder %s15, 0
    %p42 = por %p40, %p41
    %s44 = sadd.s32 %s43, 1
    %p47 = scmp.eq.s32.totalorder %s9, 1
    %p48 = scmp.ne.s32.totalorder %s43, %s45
    %p49 = scmp.eq.s32.totalorder %s9, 0
    %p50 = por %p48, %p49
    %p51 = scmp.ne.s32.totalorder %s43, %s45
    %p52 = scmp.eq.s32.totalorder %s14, 1
    %p53 = por %p51, %p52
    %p54 = scmp.ne.s32.totalorder %s45, %s46
    %p55 = scmp.eq.s32.totalorder %s14, 0
    %p56 = por %p54, %p55
    %p57 = scmp.ne.s32.totalorder %s45, %s46
    %p58 = scmp.eq.s32.totalorder %s15, 1
    %p59 = por %p57, %p58
    %p61 = scmp.ne.s32.totalorder %s46, %s60
    %p62 = scmp.eq.s32.totalorder %s15, 0
    %p63 = por %p61, %p62
    %s65 = sadd.s32 %s64, 1
    %p68 = scmp.eq.s32.totalorder %s9, 1
    %p69 = scmp.ne.s32.totalorder %s64, %s66
    %p70 = scmp.eq.s32.totalorder %s9, 0
    %p71 = por %p69, %p70
    %p72 = scmp.ne.s32.totalorder %s64, %s66
    %p73 = scmp.eq.s32.totalorder %s14, 1
    %p74 = por %p72, %p73
    %p75 = scmp.ne.s32.totalorder %s66, %s67
    %p76 = scmp.eq.s32.totalorder %s14, 0
    %p77 = por %p75, %p76
    %p78 = scmp.ne.s32.totalorder %s66, %s67
    %p79 = scmp.eq.s32.totalorder %s15, 1
    %p80 = por %p78, %p79
    %p82 = scmp.ne.s32.totalorder %s67, %s81
    %p83 = scmp.eq.s32.totalorder %s15, 0
    %p84 = por %p82, %p83
    %s85 = ssub.s32 %s9, %s16
    %p86 = scmp.eq.s32.totalorder %s85, 0
    %s88 = sadd.s32 %s87, 1
    %s89 = scalar_select %p86, %s87, %s88
    %p92 = pneg %p86
    %p93 = scmp.eq.s32.totalorder %s9, 1
    %p94 = por %p92, %p93
    %p95 = scmp.ne.s32.totalorder %s87, %s90
    %p96 = scmp.eq.s32.totalorder %s9, 0
    %p97 = por %p95, %p96
    %p98 = scmp.ne.s32.totalorder %s87, %s90
    %p99 = scmp.eq.s32.totalorder %s14, 1
    %p100 = por %p98, %p99
    %p101 = scmp.ne.s32.totalorder %s90, %s91
    %p102 = scmp.eq.s32.totalorder %s14, 0
    %p103 = por %p101, %p102
    %p104 = scmp.ne.s32.totalorder %s90, %s91
    %p105 = scmp.eq.s32.totalorder %s15, 1
    %p106 = por %p104, %p105
    %p108 = scmp.ne.s32.totalorder %s91, %s107
    %p109 = scmp.eq.s32.totalorder %s15, 0
    %p110 = por %p108, %p109
    %p111 = scmp.le.s32.totalorder 1, %s9
    %p112 = scmp.lt.s32.totalorder %s9, 3
    %p113 = pnand %p111, %p112
    %p114 = pneg %p113
    // Predicated region
    $region9: #{cnn_lstm_state_forward.3} parent=5 // pred_check
      _
    $region10: #{cnn_lstm_state_forward.3} parent=5 // pred_check_branch
      %116 = sbr.rel (%p113) target = $region12
    $region11: #{cnn_lstm_state_forward.3} parent=5 // pred_region
      %s117 = ssub.s32 %s9, 1
      // Predicated region
      $region13: #{cnn_lstm_state_forward.3} parent=11 // pred_check
        %p118 = pneg %p56
      $region14: #{cnn_lstm_state_forward.3} parent=11 // pred_check_branch
        %120 = sbr.rel (%p118) target = $region16
      $region15: #{cnn_lstm_state_forward.3} parent=11 // pred_region
        _
      $region16: #{cnn_lstm_state_forward.3} parent=11 // pred_fallthru
        _
      // Predicated region
      $region17: #{cnn_lstm_state_forward.3} parent=11 // pred_check
        %p121 = pneg %p77
      $region18: #{cnn_lstm_state_forward.3} parent=11 // pred_check_branch
        %123 = sbr.rel (%p121) target = $region20
      $region19: #{cnn_lstm_state_forward.3} parent=11 // pred_region
        _
      $region20: #{cnn_lstm_state_forward.3} parent=11 // pred_fallthru
        _
    $region12: #{cnn_lstm_state_forward.3} parent=5 // pred_fallthru
      _
    %p124 = scmp.lt.s32.totalorder %s9, 2
    // Predicated region
    $region21: #{cnn_lstm_state_forward.3} parent=5 // pred_check
      %p125 = pneg %p124
    $region22: #{cnn_lstm_state_forward.3} parent=5 // pred_check_branch
      %127 = sbr.rel (%p125) target = $region24
    $region23: #{cnn_lstm_state_forward.3} parent=5 // pred_region
      // Predicated region
      $region25: #{cnn_lstm_state_forward.3} parent=23 // pred_check
        %p128 = pneg %p29
      $region26: #{cnn_lstm_state_forward.3} parent=23 // pred_check_branch
        %130 = sbr.rel (%p128) target = $region28
      $region27: #{cnn_lstm_state_forward.3} parent=23 // pred_region
        %s131 = smul.u32 8, %s9
        %p132 = scmp.lt.s32.totalorder %s131, 15
        %s133 = scalar_select %p132, %s131, 15
        %s134 = smul.addr %s133, 10
        %s135 = smul.addr %s134, 8
        %s136 = scalar_lea.vmem %s0, %s135
        %s137 = smul.u32 8, %s9
      $region28: #{cnn_lstm_state_forward.3} parent=23 // pred_fallthru
        _
    $region24: #{cnn_lstm_state_forward.3} parent=5 // pred_fallthru
      _
    %p138 = scmp.le.s32.totalorder 1, %s9
    %p139 = scmp.lt.s32.totalorder %s9, 3
    %p140 = pnand %p138, %p139
    %p141 = pneg %p140
    // Predicated region
    $region29: #{cnn_lstm_state_forward.3} parent=5 // pred_check
      _
    $region30: #{cnn_lstm_state_forward.3} parent=5 // pred_check_branch
      %143 = sbr.rel (%p140) target = $region32
    $region31: #{cnn_lstm_state_forward.3} parent=5 // pred_region
      %s144 = ssub.s32 %s9, 1
      %s145 = smul.u32 8, %s14
      %p146 = scmp.lt.s32.totalorder %s145, 15
      %s147 = scalar_select %p146, %s145, 15
      %s148 = smul.addr %s147, 10
      %s149 = smul.addr %s148, 8
      %s150 = scalar_lea.vmem %s0, %s149
      %p151 = pneg %p35
      %p152 = pneg %p32
      %p153 = pneg %p56
      %p154 = pneg %p53
      %p155 = pneg %p77
      %p156 = pneg %p74
      %p157 = pneg %p103
      %p158 = pneg %p100
      %s159 = smul.u32 8, %s14
      %p160 = scmp.lt.s32.totalorder %s159, 15
      %s161 = scalar_select %p160, %s159, 15
      %s162 = smul.addr %s161, 2
      %s163 = smul.addr %s162, 8
      %s164 = scalar_lea.vmem %s3, %s163
      %s165 = smul.u32 8, %s14
      %p166 = scmp.lt.s32.totalorder %s165, 15
      %s167 = scalar_select %p166, %s165, 15
      %s168 = smul.addr %s167, 10
      %s169 = smul.addr %s168, 8
      %s170 = scalar_lea.vmem %s0, %s169
      %s171 = smul.u32 8, %s14
      %s172 = smul.u32 8, %s14
      %p173 = scmp.lt.s32.totalorder %s172, 15
      %s174 = scalar_select %p173, %s172, 15
      %s175 = smul.addr %s174, 2
      %s176 = smul.addr %s175, 8
      %s177 = scalar_lea.vmem %s3, %s176
      %s178 = smul.u32 8, %s14
      %v179 = vld [vmem:[%s1] sm:$0xff]
      %v180 = vld [vmem:[%s2] sm:$0xff]
      %v181 = vld [vmem:[%s170] sm:$0xff]
      %v182 = vld [vmem:[%s170 + $0x8] sm:$0xff]
      %v183 = vld [vmem:[%s170 + $0x10] sm:$0xff]
      %v184 = vld [vmem:[%s170 + $0x18] sm:$0xff]
      %v185 = vld [vmem:[%s170 + $0x20] sm:$0xff]
      %v186 = vld [vmem:[%s170 + $0x28] sm:$0xff]
      %v187 = vld [vmem:[%s170 + $0x30] sm:$0xff]
      %v188 = vld [vmem:[%s170 + $0x38] sm:$0xff]
      %v189 = vld [vmem:[%s170 + $0x40] sm:$0xf]
      %v190 = vld [vmem:[%s170 + $0x48] sm:$0xf]
      %192 = vset.pattern.permute.xlu0 0
      %193 = vperm.xlu0 %192, %v180
      %v194 = vpop.permute.xlu0 %193
      %vm196 = vcmask 293888
      %v198 = vsel %vm196, %v179, 0
      %vm200 = vcmask 1043456
      %v202 = vsel %vm200, %v189, 0
      %v205 = vsel %vm200, %v190, 0
      %207 = vmatprep.subr.mxu0 %v182
      %208 = vmatpush1.msra.mxu0 %v181
      %209 = vmatprep.subr.mxu0 %v184
      %210 = vmatpush1.msra.mxu0 %v183
      %211 = vmatprep.subr.mxu0 %v186
      %212 = vmatpush1.msra.mxu0 %v185
      %213 = vmatprep.subr.mxu0 %v188
      %214 = vmatpush1.msra.mxu0 %v187
      %215 = vmatprep.subr.mxu0 %v205
      %216 = vmatpush1.msra.mxu0 %v202
      %217 = vmatprep.subr.mxu0 0.0
      %218 = vmatpush1.msra.mxu0 0.0
      %219 = vmatprep.subr.mxu0 0.0
      %220 = vmatpush1.msra.mxu0 0.0
      %221 = vmatprep.subr.mxu0 0.0
      %222 = vmatpush1.msra.mxu0 0.0
      %223 = vmatprep.subr.mxu0 0.0
      %224 = vmatpush1.msra.mxu0 0.0
      %225 = vmatprep.subr.mxu0 0.0
      %226 = vmatpush1.msra.mxu0 0.0
      %227 = vmatprep.subr.mxu0 0.0
      %228 = vmatpush1.msra.mxu0 0.0
      %229 = vmatprep.subr.mxu0 0.0
      %230 = vmatpush1.msra.mxu0 0.0
      %231 = vmatprep.subr.mxu0 0.0
      %232 = vmatpush1.msra.mxu0 0.0
      %233 = vmatprep.subr.mxu0 0.0
      %234 = vmatpush1.msra.mxu0 0.0
      %235 = vmatprep.subr.mxu0 0.0
      %236 = vmatpush1.msra.mxu0 0.0
      %237 = vmatprep.subr.mxu0 0.0
      %238 = vmatpush1.msra.mxu0 0.0
      %239 = vmatprep.subr.mxu0 0.0
      %240 = vmatpush1.msra.mxu0 0.0
      %241 = vmatprep.subr.mxu0 0.0
      %242 = vmatpush1.msra.mxu0 0.0
      %243 = vmatprep.subr.mxu0 0.0
      %244 = vmatpush1.msra.mxu0 0.0
      %245 = vmatprep.subr.mxu0 0.0
      %246 = vmatpush1.msra.mxu0 0.0
      %247 = vmatprep.subr.mxu0 0.0
      %248 = vmatpush1.msra.mxu0 0.0
      %249 = vmatprep.subr.mxu0 0.0
      %250 = vmatpush1.msra.mxu0 0.0
      %251 = vmatprep.subr.mxu0 0.0
      %252 = vmatpush1.msra.mxu0 0.0
      %253 = vmatprep.subr.mxu0 0.0
      %254 = vmatpush1.msra.mxu0 0.0
      %255 = vmatprep.subr.mxu0 0.0
      %256 = vmatpush1.msra.mxu0 0.0
      %257 = vmatprep.subr.mxu0 0.0
      %258 = vmatpush1.msra.mxu0 0.0
      %259 = vmatprep.subr.mxu0 0.0
      %260 = vmatpush1.msra.mxu0 0.0
      %261 = vmatprep.subr.mxu0 0.0
      %262 = vmatpush1.msra.mxu0 0.0
      %263 = vmatprep.subr.mxu0 0.0
      %264 = vmatpush1.msra.mxu0 0.0
      %265 = vmatprep.subr.mxu0 0.0
      %266 = vmatpush1.msra.mxu0 0.0
      %267 = vmatprep.subr.mxu0 0.0
      %268 = vmatpush1.msra.mxu0 0.0
      %269 = vmatprep.subr.mxu0 0.0
      %270 = vmatpush1.msra.mxu0 0.0
      %271 = vmatprep.mubr.f32.mxu0 0.0
      %272 = vmatmul.mubr.f32.gmra.mrb[0].mxu0 %v198
      %v273 = vpop.f32.mrb[0].mxu0
      %v274 = vadd.f32 %v194, %v273
      %v275 = vpop.f32.mrb[0].mxu0
      %v276 = vadd.f32 %v194, %v275
      %277 = vdwg.mxu0
      %v278 = vmax.f32 %v274, 0.0
      %v279 = vmax.f32 %v276, 0.0
      %280 = vst [vmem:[%s177] sm:$0xff] %v278
      %281 = vst [vmem:[%s177 + $0x8] sm:$0xff] %v279
      %s282 = scalar_lea.vmem %s170, 80
      %v283 = vld [vmem:[%s282] sm:$0xff]
      %v284 = vld [vmem:[%s282 + $0x8] sm:$0xff]
      %v285 = vld [vmem:[%s282 + $0x10] sm:$0xff]
      %v286 = vld [vmem:[%s282 + $0x18] sm:$0xff]
      %v287 = vld [vmem:[%s282 + $0x20] sm:$0xff]
      %v288 = vld [vmem:[%s282 + $0x28] sm:$0xff]
      %v289 = vld [vmem:[%s282 + $0x30] sm:$0xff]
      %v290 = vld [vmem:[%s282 + $0x38] sm:$0xff]
      %v291 = vld [vmem:[%s282 + $0x40] sm:$0xf]
      %v292 = vld [vmem:[%s282 + $0x48] sm:$0xf]
      %v294 = vsel %vm200, %v291, 0
      %v297 = vsel %vm200, %v292, 0
      %299 = vmatprep.subr.mxu0 %v284
      %300 = vmatpush1.msra.mxu0 %v283
      %301 = vmatprep.subr.mxu0 %v286
      %302 = vmatpush1.msra.mxu0 %v285
      %303 = vmatprep.subr.mxu0 %v288
      %304 = vmatpush1.msra.mxu0 %v287
      %305 = vmatprep.subr.mxu0 %v290
      %306 = vmatpush1.msra.mxu0 %v289
      %307 = vmatprep.subr.mxu0 %v297
      %308 = vmatpush1.msra.mxu0 %v294
      %309 = vmatprep.subr.mxu0 0.0
      %310 = vmatpush1.msra.mxu0 0.0
      %311 = vmatprep.subr.mxu0 0.0
      %312 = vmatpush1.msra.mxu0 0.0
      %313 = vmatprep.subr.mxu0 0.0
      %314 = vmatpush1.msra.mxu0 0.0
      %315 = vmatprep.subr.mxu0 0.0
      %316 = vmatpush1.msra.mxu0 0.0
      %317 = vmatprep.subr.mxu0 0.0
      %318 = vmatpush1.msra.mxu0 0.0
      %319 = vmatprep.subr.mxu0 0.0
      %320 = vmatpush1.msra.mxu0 0.0
      %321 = vmatprep.subr.mxu0 0.0
      %322 = vmatpush1.msra.mxu0 0.0
      %323 = vmatprep.subr.mxu0 0.0
      %324 = vmatpush1.msra.mxu0 0.0
      %325 = vmatprep.subr.mxu0 0.0
      %326 = vmatpush1.msra.mxu0 0.0
      %327 = vmatprep.subr.mxu0 0.0
      %328 = vmatpush1.msra.mxu0 0.0
      %329 = vmatprep.subr.mxu0 0.0
      %330 = vmatpush1.msra.mxu0 0.0
      %331 = vmatprep.subr.mxu0 0.0
      %332 = vmatpush1.msra.mxu0 0.0
      %333 = vmatprep.subr.mxu0 0.0
      %334 = vmatpush1.msra.mxu0 0.0
      %335 = vmatprep.subr.mxu0 0.0
      %336 = vmatpush1.msra.mxu0 0.0
      %337 = vmatprep.subr.mxu0 0.0
      %338 = vmatpush1.msra.mxu0 0.0
      %339 = vmatprep.subr.mxu0 0.0
      %340 = vmatpush1.msra.mxu0 0.0
      %341 = vmatprep.subr.mxu0 0.0
      %342 = vmatpush1.msra.mxu0 0.0
      %343 = vmatprep.subr.mxu0 0.0
      %344 = vmatpush1.msra.mxu0 0.0
      %345 = vmatprep.subr.mxu0 0.0
      %346 = vmatpush1.msra.mxu0 0.0
      %347 = vmatprep.subr.mxu0 0.0
      %348 = vmatpush1.msra.mxu0 0.0
      %349 = vmatprep.subr.mxu0 0.0
      %350 = vmatpush1.msra.mxu0 0.0
      %351 = vmatprep.subr.mxu0 0.0
      %352 = vmatpush1.msra.mxu0 0.0
      %353 = vmatprep.subr.mxu0 0.0
      %354 = vmatpush1.msra.mxu0 0.0
      %355 = vmatprep.subr.mxu0 0.0
      %356 = vmatpush1.msra.mxu0 0.0
      %357 = vmatprep.subr.mxu0 0.0
      %358 = vmatpush1.msra.mxu0 0.0
      %359 = vmatprep.subr.mxu0 0.0
      %360 = vmatpush1.msra.mxu0 0.0
      %361 = vmatprep.subr.mxu0 0.0
      %362 = vmatpush1.msra.mxu0 0.0
      %363 = vmatprep.mubr.f32.mxu0 0.0
      %364 = vmatmul.mubr.f32.gmra.mrb[0].mxu0 %v198
      %v365 = vpop.f32.mrb[0].mxu0
      %v366 = vadd.f32 %v194, %v365
      %v367 = vpop.f32.mrb[0].mxu0
      %v368 = vadd.f32 %v194, %v367
      %369 = vdwg.mxu0
      %v370 = vmax.f32 %v366, 0.0
      %v371 = vmax.f32 %v368, 0.0
      %s372 = scalar_lea.vmem %s177, 16
      %373 = vst [vmem:[%s372] sm:$0xff] %v370
      %374 = vst [vmem:[%s372 + $0x8] sm:$0xff] %v371
      %s375 = scalar_lea.vmem %s170, 160
      %v376 = vld [vmem:[%s375] sm:$0xff]
      %v377 = vld [vmem:[%s375 + $0x8] sm:$0xff]
      %v378 = vld [vmem:[%s375 + $0x10] sm:$0xff]
      %v379 = vld [vmem:[%s375 + $0x18] sm:$0xff]
      %v380 = vld [vmem:[%s375 + $0x20] sm:$0xff]
      %v381 = vld [vmem:[%s375 + $0x28] sm:$0xff]
      %v382 = vld [vmem:[%s375 + $0x30] sm:$0xff]
      %v383 = vld [vmem:[%s375 + $0x38] sm:$0xff]
      %v384 = vld [vmem:[%s375 + $0x40] sm:$0xf]
      %v385 = vld [vmem:[%s375 + $0x48] sm:$0xf]
      %v387 = vsel %vm200, %v384, 0
      %v390 = vsel %vm200, %v385, 0
      %392 = vmatprep.subr.mxu0 %v377
      %393 = vmatpush1.msra.mxu0 %v376
      %394 = vmatprep.subr.mxu0 %v379
      %395 = vmatpush1.msra.mxu0 %v378
      %396 = vmatprep.subr.mxu0 %v381
      %397 = vmatpush1.msra.mxu0 %v380
      %398 = vmatprep.subr.mxu0 %v383
      %399 = vmatpush1.msra.mxu0 %v382
      %400 = vmatprep.subr.mxu0 %v390
      %401 = vmatpush1.msra.mxu0 %v387
      %402 = vmatprep.subr.mxu0 0.0
      %403 = vmatpush1.msra.mxu0 0.0
      %404 = vmatprep.subr.mxu0 0.0
      %405 = vmatpush1.msra.mxu0 0.0
      %406 = vmatprep.subr.mxu0 0.0
      %407 = vmatpush1.msra.mxu0 0.0
      %408 = vmatprep.subr.mxu0 0.0
      %409 = vmatpush1.msra.mxu0 0.0
      %410 = vmatprep.subr.mxu0 0.0
      %411 = vmatpush1.msra.mxu0 0.0
      %412 = vmatprep.subr.mxu0 0.0
      %413 = vmatpush1.msra.mxu0 0.0
      %414 = vmatprep.subr.mxu0 0.0
      %415 = vmatpush1.msra.mxu0 0.0
      %416 = vmatprep.subr.mxu0 0.0
      %417 = vmatpush1.msra.mxu0 0.0
      %418 = vmatprep.subr.mxu0 0.0
      %419 = vmatpush1.msra.mxu0 0.0
      %420 = vmatprep.subr.mxu0 0.0
      %421 = vmatpush1.msra.mxu0 0.0
      %422 = vmatprep.subr.mxu0 0.0
      %423 = vmatpush1.msra.mxu0 0.0
      %424 = vmatprep.subr.mxu0 0.0
      %425 = vmatpush1.msra.mxu0 0.0
      %426 = vmatprep.subr.mxu0 0.0
      %427 = vmatpush1.msra.mxu0 0.0
      %428 = vmatprep.subr.mxu0 0.0
      %429 = vmatpush1.msra.mxu0 0.0
      %430 = vmatprep.subr.mxu0 0.0
      %431 = vmatpush1.msra.mxu0 0.0
      %432 = vmatprep.subr.mxu0 0.0
      %433 = vmatpush1.msra.mxu0 0.0
      %434 = vmatprep.subr.mxu0 0.0
      %435 = vmatpush1.msra.mxu0 0.0
      %436 = vmatprep.subr.mxu0 0.0
      %437 = vmatpush1.msra.mxu0 0.0
      %438 = vmatprep.subr.mxu0 0.0
      %439 = vmatpush1.msra.mxu0 0.0
      %440 = vmatprep.subr.mxu0 0.0
      %441 = vmatpush1.msra.mxu0 0.0
      %442 = vmatprep.subr.mxu0 0.0
      %443 = vmatpush1.msra.mxu0 0.0
      %444 = vmatprep.subr.mxu0 0.0
      %445 = vmatpush1.msra.mxu0 0.0
      %446 = vmatprep.subr.mxu0 0.0
      %447 = vmatpush1.msra.mxu0 0.0
      %448 = vmatprep.subr.mxu0 0.0
      %449 = vmatpush1.msra.mxu0 0.0
      %450 = vmatprep.subr.mxu0 0.0
      %451 = vmatpush1.msra.mxu0 0.0
      %452 = vmatprep.subr.mxu0 0.0
      %453 = vmatpush1.msra.mxu0 0.0
      %454 = vmatprep.subr.mxu0 0.0
      %455 = vmatpush1.msra.mxu0 0.0
      %456 = vmatprep.mubr.f32.mxu0 0.0
      %457 = vmatmul.mubr.f32.gmra.mrb[0].mxu0 %v198
      %v458 = vpop.f32.mrb[0].mxu0
      %v459 = vadd.f32 %v194, %v458
      %v460 = vpop.f32.mrb[0].mxu0
      %v461 = vadd.f32 %v194, %v460
      %462 = vdwg.mxu0
      %v463 = vmax.f32 %v459, 0.0
      %v464 = vmax.f32 %v461, 0.0
      %s465 = scalar_lea.vmem %s177, 32
      %466 = vst [vmem:[%s465] sm:$0xff] %v463
      %467 = vst [vmem:[%s465 + $0x8] sm:$0xff] %v464
      %s468 = scalar_lea.vmem %s170, 240
      %v469 = vld [vmem:[%s468] sm:$0xff]
      %v470 = vld [vmem:[%s468 + $0x8] sm:$0xff]
      %v471 = vld [vmem:[%s468 + $0x10] sm:$0xff]
      %v472 = vld [vmem:[%s468 + $0x18] sm:$0xff]
      %v473 = vld [vmem:[%s468 + $0x20] sm:$0xff]
      %v474 = vld [vmem:[%s468 + $0x28] sm:$0xff]
      %v475 = vld [vmem:[%s468 + $0x30] sm:$0xff]
      %v476 = vld [vmem:[%s468 + $0x38] sm:$0xff]
      %v477 = vld [vmem:[%s468 + $0x40] sm:$0xf]
      %v478 = vld [vmem:[%s468 + $0x48] sm:$0xf]
      %v480 = vsel %vm200, %v477, 0
      %v483 = vsel %vm200, %v478, 0
      %485 = vmatprep.subr.mxu0 %v470
      %486 = vmatpush1.msra.mxu0 %v469
      %487 = vmatprep.subr.mxu0 %v472
      %488 = vmatpush1.msra.mxu0 %v471
      %489 = vmatprep.subr.mxu0 %v474
      %490 = vmatpush1.msra.mxu0 %v473
      %491 = vmatprep.subr.mxu0 %v476
      %492 = vmatpush1.msra.mxu0 %v475
      %493 = vmatprep.subr.mxu0 %v483
      %494 = vmatpush1.msra.mxu0 %v480
      %495 = vmatprep.subr.mxu0 0.0
      %496 = vmatpush1.msra.mxu0 0.0
      %497 = vmatprep.subr.mxu0 0.0
      %498 = vmatpush1.msra.mxu0 0.0
      %499 = vmatprep.subr.mxu0 0.0
      %500 = vmatpush1.msra.mxu0 0.0
      %501 = vmatprep.subr.mxu0 0.0
      %502 = vmatpush1.msra.mxu0 0.0
      %503 = vmatprep.subr.mxu0 0.0
      %504 = vmatpush1.msra.mxu0 0.0
      %505 = vmatprep.subr.mxu0 0.0
      %506 = vmatpush1.msra.mxu0 0.0
      %507 = vmatprep.subr.mxu0 0.0
      %508 = vmatpush1.msra.mxu0 0.0
      %509 = vmatprep.subr.mxu0 0.0
      %510 = vmatpush1.msra.mxu0 0.0
      %511 = vmatprep.subr.mxu0 0.0
      %512 = vmatpush1.msra.mxu0 0.0
      %513 = vmatprep.subr.mxu0 0.0
      %514 = vmatpush1.msra.mxu0 0.0
      %515 = vmatprep.subr.mxu0 0.0
      %516 = vmatpush1.msra.mxu0 0.0
      %517 = vmatprep.subr.mxu0 0.0
      %518 = vmatpush1.msra.mxu0 0.0
      %519 = vmatprep.subr.mxu0 0.0
      %520 = vmatpush1.msra.mxu0 0.0
      %521 = vmatprep.subr.mxu0 0.0
      %522 = vmatpush1.msra.mxu0 0.0
      %523 = vmatprep.subr.mxu0 0.0
      %524 = vmatpush1.msra.mxu0 0.0
      %525 = vmatprep.subr.mxu0 0.0
      %526 = vmatpush1.msra.mxu0 0.0
      %527 = vmatprep.subr.mxu0 0.0
      %528 = vmatpush1.msra.mxu0 0.0
      %529 = vmatprep.subr.mxu0 0.0
      %530 = vmatpush1.msra.mxu0 0.0
      %531 = vmatprep.subr.mxu0 0.0
      %532 = vmatpush1.msra.mxu0 0.0
      %533 = vmatprep.subr.mxu0 0.0
      %534 = vmatpush1.msra.mxu0 0.0
      %535 = vmatprep.subr.mxu0 0.0
      %536 = vmatpush1.msra.mxu0 0.0
      %537 = vmatprep.subr.mxu0 0.0
      %538 = vmatpush1.msra.mxu0 0.0
      %539 = vmatprep.subr.mxu0 0.0
      %540 = vmatpush1.msra.mxu0 0.0
      %541 = vmatprep.subr.mxu0 0.0
      %542 = vmatpush1.msra.mxu0 0.0
      %543 = vmatprep.subr.mxu0 0.0
      %544 = vmatpush1.msra.mxu0 0.0
      %545 = vmatprep.subr.mxu0 0.0
      %546 = vmatpush1.msra.mxu0 0.0
      %547 = vmatprep.subr.mxu0 0.0
      %548 = vmatpush1.msra.mxu0 0.0
      %549 = vmatprep.mubr.f32.mxu0 0.0
      %550 = vmatmul.mubr.f32.gmra.mrb[0].mxu0 %v198
      %v551 = vpop.f32.mrb[0].mxu0
      %v552 = vadd.f32 %v194, %v551
      %v553 = vpop.f32.mrb[0].mxu0
      %v554 = vadd.f32 %v194, %v553
      %555 = vdwg.mxu0
      %v556 = vmax.f32 %v552, 0.0
      %v557 = vmax.f32 %v554, 0.0
      %s558 = scalar_lea.vmem %s177, 48
      %559 = vst [vmem:[%s558] sm:$0xff] %v556
      %560 = vst [vmem:[%s558 + $0x8] sm:$0xff] %v557
      %s561 = scalar_lea.vmem %s170, 320
      %v562 = vld [vmem:[%s561] sm:$0xff]
      %v563 = vld [vmem:[%s561 + $0x8] sm:$0xff]
      %v564 = vld [vmem:[%s561 + $0x10] sm:$0xff]
      %v565 = vld [vmem:[%s561 + $0x18] sm:$0xff]
      %v566 = vld [vmem:[%s561 + $0x20] sm:$0xff]
      %v567 = vld [vmem:[%s561 + $0x28] sm:$0xff]
      %v568 = vld [vmem:[%s561 + $0x30] sm:$0xff]
      %v569 = vld [vmem:[%s561 + $0x38] sm:$0xff]
      %v570 = vld [vmem:[%s561 + $0x40] sm:$0xf]
      %v571 = vld [vmem:[%s561 + $0x48] sm:$0xf]
      %v573 = vsel %vm200, %v570, 0
      %v576 = vsel %vm200, %v571, 0
      %578 = vmatprep.subr.mxu0 %v563
      %579 = vmatpush1.msra.mxu0 %v562
      %580 = vmatprep.subr.mxu0 %v565
      %581 = vmatpush1.msra.mxu0 %v564
      %582 = vmatprep.subr.mxu0 %v567
      %583 = vmatpush1.msra.mxu0 %v566
      %584 = vmatprep.subr.mxu0 %v569
      %585 = vmatpush1.msra.mxu0 %v568
      %586 = vmatprep.subr.mxu0 %v576
      %587 = vmatpush1.msra.mxu0 %v573
      %588 = vmatprep.subr.mxu0 0.0
      %589 = vmatpush1.msra.mxu0 0.0
      %590 = vmatprep.subr.mxu0 0.0
      %591 = vmatpush1.msra.mxu0 0.0
      %592 = vmatprep.subr.mxu0 0.0
      %593 = vmatpush1.msra.mxu0 0.0
      %594 = vmatprep.subr.mxu0 0.0
      %595 = vmatpush1.msra.mxu0 0.0
      %596 = vmatprep.subr.mxu0 0.0
      %597 = vmatpush1.msra.mxu0 0.0
      %598 = vmatprep.subr.mxu0 0.0
      %599 = vmatpush1.msra.mxu0 0.0
      %600 = vmatprep.subr.mxu0 0.0
      %601 = vmatpush1.msra.mxu0 0.0
      %602 = vmatprep.subr.mxu0 0.0
      %603 = vmatpush1.msra.mxu0 0.0
      %604 = vmatprep.subr.mxu0 0.0
      %605 = vmatpush1.msra.mxu0 0.0
      %606 = vmatprep.subr.mxu0 0.0
      %607 = vmatpush1.msra.mxu0 0.0
      %608 = vmatprep.subr.mxu0 0.0
      %609 = vmatpush1.msra.mxu0 0.0
      %610 = vmatprep.subr.mxu0 0.0
      %611 = vmatpush1.msra.mxu0 0.0
      %612 = vmatprep.subr.mxu0 0.0
      %613 = vmatpush1.msra.mxu0 0.0
      %614 = vmatprep.subr.mxu0 0.0
      %615 = vmatpush1.msra.mxu0 0.0
      %616 = vmatprep.subr.mxu0 0.0
      %617 = vmatpush1.msra.mxu0 0.0
      %618 = vmatprep.subr.mxu0 0.0
      %619 = vmatpush1.msra.mxu0 0.0
      %620 = vmatprep.subr.mxu0 0.0
      %621 = vmatpush1.msra.mxu0 0.0
      %622 = vmatprep.subr.mxu0 0.0
      %623 = vmatpush1.msra.mxu0 0.0
      %624 = vmatprep.subr.mxu0 0.0
      %625 = vmatpush1.msra.mxu0 0.0
      %626 = vmatprep.subr.mxu0 0.0
      %627 = vmatpush1.msra.mxu0 0.0
      %628 = vmatprep.subr.mxu0 0.0
      %629 = vmatpush1.msra.mxu0 0.0
      %630 = vmatprep.subr.mxu0 0.0
      %631 = vmatpush1.msra.mxu0 0.0
      %632 = vmatprep.subr.mxu0 0.0
      %633 = vmatpush1.msra.mxu0 0.0
      %634 = vmatprep.subr.mxu0 0.0
      %635 = vmatpush1.msra.mxu0 0.0
      %636 = vmatprep.subr.mxu0 0.0
      %637 = vmatpush1.msra.mxu0 0.0
      %638 = vmatprep.subr.mxu0 0.0
      %639 = vmatpush1.msra.mxu0 0.0
      %640 = vmatprep.subr.mxu0 0.0
      %641 = vmatpush1.msra.mxu0 0.0
      %642 = vmatprep.mubr.f32.mxu0 0.0
      %643 = vmatmul.mubr.f32.gmra.mrb[0].mxu0 %v198
      %v644 = vpop.f32.mrb[0].mxu0
      %v645 = vadd.f32 %v194, %v644
      %v646 = vpop.f32.mrb[0].mxu0
      %v647 = vadd.f32 %v194, %v646
      %648 = vdwg.mxu0
      %v649 = vmax.f32 %v645, 0.0
      %v650 = vmax.f32 %v647, 0.0
      %s651 = scalar_lea.vmem %s177, 64
      %652 = vst [vmem:[%s651] sm:$0xff] %v649
      %653 = vst [vmem:[%s651 + $0x8] sm:$0xff] %v650
      %s654 = scalar_lea.vmem %s170, 400
      %v655 = vld [vmem:[%s654] sm:$0xff]
      %v656 = vld [vmem:[%s654 + $0x8] sm:$0xff]
      %v657 = vld [vmem:[%s654 + $0x10] sm:$0xff]
      %v658 = vld [vmem:[%s654 + $0x18] sm:$0xff]
      %v659 = vld [vmem:[%s654 + $0x20] sm:$0xff]
      %v660 = vld [vmem:[%s654 + $0x28] sm:$0xff]
      %v661 = vld [vmem:[%s654 + $0x30] sm:$0xff]
      %v662 = vld [vmem:[%s654 + $0x38] sm:$0xff]
      %v663 = vld [vmem:[%s654 + $0x40] sm:$0xf]
      %v664 = vld [vmem:[%s654 + $0x48] sm:$0xf]
      %v666 = vsel %vm200, %v663, 0
      %v669 = vsel %vm200, %v664, 0
      %671 = vmatprep.subr.mxu0 %v656
      %672 = vmatpush1.msra.mxu0 %v655
      %673 = vmatprep.subr.mxu0 %v658
      %674 = vmatpush1.msra.mxu0 %v657
      %675 = vmatprep.subr.mxu0 %v660
      %676 = vmatpush1.msra.mxu0 %v659
      %677 = vmatprep.subr.mxu0 %v662
      %678 = vmatpush1.msra.mxu0 %v661
      %679 = vmatprep.subr.mxu0 %v669
      %680 = vmatpush1.msra.mxu0 %v666
      %681 = vmatprep.subr.mxu0 0.0
      %682 = vmatpush1.msra.mxu0 0.0
      %683 = vmatprep.subr.mxu0 0.0
      %684 = vmatpush1.msra.mxu0 0.0
      %685 = vmatprep.subr.mxu0 0.0
      %686 = vmatpush1.msra.mxu0 0.0
      %687 = vmatprep.subr.mxu0 0.0
      %688 = vmatpush1.msra.mxu0 0.0
      %689 = vmatprep.subr.mxu0 0.0
      %690 = vmatpush1.msra.mxu0 0.0
      %691 = vmatprep.subr.mxu0 0.0
      %692 = vmatpush1.msra.mxu0 0.0
      %693 = vmatprep.subr.mxu0 0.0
      %694 = vmatpush1.msra.mxu0 0.0
      %695 = vmatprep.subr.mxu0 0.0
      %696 = vmatpush1.msra.mxu0 0.0
      %697 = vmatprep.subr.mxu0 0.0
      %698 = vmatpush1.msra.mxu0 0.0
      %699 = vmatprep.subr.mxu0 0.0
      %700 = vmatpush1.msra.mxu0 0.0
      %701 = vmatprep.subr.mxu0 0.0
      %702 = vmatpush1.msra.mxu0 0.0
      %703 = vmatprep.subr.mxu0 0.0
      %704 = vmatpush1.msra.mxu0 0.0
      %705 = vmatprep.subr.mxu0 0.0
      %706 = vmatpush1.msra.mxu0 0.0
      %707 = vmatprep.subr.mxu0 0.0
      %708 = vmatpush1.msra.mxu0 0.0
      %709 = vmatprep.subr.mxu0 0.0
      %710 = vmatpush1.msra.mxu0 0.0
      %711 = vmatprep.subr.mxu0 0.0
      %712 = vmatpush1.msra.mxu0 0.0
      %713 = vmatprep.subr.mxu0 0.0
      %714 = vmatpush1.msra.mxu0 0.0
      %715 = vmatprep.subr.mxu0 0.0
      %716 = vmatpush1.msra.mxu0 0.0
      %717 = vmatprep.subr.mxu0 0.0
      %718 = vmatpush1.msra.mxu0 0.0
      %719 = vmatprep.subr.mxu0 0.0
      %720 = vmatpush1.msra.mxu0 0.0
      %721 = vmatprep.subr.mxu0 0.0
      %722 = vmatpush1.msra.mxu0 0.0
      %723 = vmatprep.subr.mxu0 0.0
      %724 = vmatpush1.msra.mxu0 0.0
      %725 = vmatprep.subr.mxu0 0.0
      %726 = vmatpush1.msra.mxu0 0.0
      %727 = vmatprep.subr.mxu0 0.0
      %728 = vmatpush1.msra.mxu0 0.0
      %729 = vmatprep.subr.mxu0 0.0
      %730 = vmatpush1.msra.mxu0 0.0
      %731 = vmatprep.subr.mxu0 0.0
      %732 = vmatpush1.msra.mxu0 0.0
      %733 = vmatprep.subr.mxu0 0.0
      %734 = vmatpush1.msra.mxu0 0.0
      %735 = vmatprep.mubr.f32.mxu0 0.0
      %736 = vmatmul.mubr.f32.gmra.mrb[0].mxu0 %v198
      %v737 = vpop.f32.mrb[0].mxu0
      %v738 = vadd.f32 %v194, %v737
      %v739 = vpop.f32.mrb[0].mxu0
      %v740 = vadd.f32 %v194, %v739
      %741 = vdwg.mxu0
      %v742 = vmax.f32 %v738, 0.0
      %v743 = vmax.f32 %v740, 0.0
      %s744 = scalar_lea.vmem %s177, 80
      %745 = vst [vmem:[%s744] sm:$0xff] %v742
      %746 = vst [vmem:[%s744 + $0x8] sm:$0xff] %v743
      %s747 = scalar_lea.vmem %s170, 480
      %v748 = vld [vmem:[%s747] sm:$0xff]
      %v749 = vld [vmem:[%s747 + $0x8] sm:$0xff]
      %v750 = vld [vmem:[%s747 + $0x10] sm:$0xff]
      %v751 = vld [vmem:[%s747 + $0x18] sm:$0xff]
      %v752 = vld [vmem:[%s747 + $0x20] sm:$0xff]
      %v753 = vld [vmem:[%s747 + $0x28] sm:$0xff]
      %v754 = vld [vmem:[%s747 + $0x30] sm:$0xff]
      %v755 = vld [vmem:[%s747 + $0x38] sm:$0xff]
      %v756 = vld [vmem:[%s747 + $0x40] sm:$0xf]
      %v757 = vld [vmem:[%s747 + $0x48] sm:$0xf]
      %v759 = vsel %vm200, %v756, 0
      %v762 = vsel %vm200, %v757, 0
      %764 = vmatprep.subr.mxu0 %v749
      %765 = vmatpush1.msra.mxu0 %v748
      %766 = vmatprep.subr.mxu0 %v751
      %767 = vmatpush1.msra.mxu0 %v750
      %768 = vmatprep.subr.mxu0 %v753
      %769 = vmatpush1.msra.mxu0 %v752
      %770 = vmatprep.subr.mxu0 %v755
      %771 = vmatpush1.msra.mxu0 %v754
      %772 = vmatprep.subr.mxu0 %v762
      %773 = vmatpush1.msra.mxu0 %v759
      %774 = vmatprep.subr.mxu0 0.0
      %775 = vmatpush1.msra.mxu0 0.0
      %776 = vmatprep.subr.mxu0 0.0
      %777 = vmatpush1.msra.mxu0 0.0
      %778 = vmatprep.subr.mxu0 0.0
      %779 = vmatpush1.msra.mxu0 0.0
      %780 = vmatprep.subr.mxu0 0.0
      %781 = vmatpush1.msra.mxu0 0.0
      %782 = vmatprep.subr.mxu0 0.0
      %783 = vmatpush1.msra.mxu0 0.0
      %784 = vmatprep.subr.mxu0 0.0
      %785 = vmatpush1.msra.mxu0 0.0
      %786 = vmatprep.subr.mxu0 0.0
      %787 = vmatpush1.msra.mxu0 0.0
      %788 = vmatprep.subr.mxu0 0.0
      %789 = vmatpush1.msra.mxu0 0.0
      %790 = vmatprep.subr.mxu0 0.0
      %791 = vmatpush1.msra.mxu0 0.0
      %792 = vmatprep.subr.mxu0 0.0
      %793 = vmatpush1.msra.mxu0 0.0
      %794 = vmatprep.subr.mxu0 0.0
      %795 = vmatpush1.msra.mxu0 0.0
      %796 = vmatprep.subr.mxu0 0.0
      %797 = vmatpush1.msra.mxu0 0.0
      %798 = vmatprep.subr.mxu0 0.0
      %799 = vmatpush1.msra.mxu0 0.0
      %800 = vmatprep.subr.mxu0 0.0
      %801 = vmatpush1.msra.mxu0 0.0
      %802 = vmatprep.subr.mxu0 0.0
      %803 = vmatpush1.msra.mxu0 0.0
      %804 = vmatprep.subr.mxu0 0.0
      %805 = vmatpush1.msra.mxu0 0.0
      %806 = vmatprep.subr.mxu0 0.0
      %807 = vmatpush1.msra.mxu0 0.0
      %808 = vmatprep.subr.mxu0 0.0
      %809 = vmatpush1.msra.mxu0 0.0
      %810 = vmatprep.subr.mxu0 0.0
      %811 = vmatpush1.msra.mxu0 0.0
      %812 = vmatprep.subr.mxu0 0.0
      %813 = vmatpush1.msra.mxu0 0.0
      %814 = vmatprep.subr.mxu0 0.0
      %815 = vmatpush1.msra.mxu0 0.0
      %816 = vmatprep.subr.mxu0 0.0
      %817 = vmatpush1.msra.mxu0 0.0
      %818 = vmatprep.subr.mxu0 0.0
      %819 = vmatpush1.msra.mxu0 0.0
      %820 = vmatprep.subr.mxu0 0.0
      %821 = vmatpush1.msra.mxu0 0.0
      %822 = vmatprep.subr.mxu0 0.0
      %823 = vmatpush1.msra.mxu0 0.0
      %824 = vmatprep.subr.mxu0 0.0
      %825 = vmatpush1.msra.mxu0 0.0
      %826 = vmatprep.subr.mxu0 0.0
      %827 = vmatpush1.msra.mxu0 0.0
      %828 = vmatprep.mubr.f32.mxu0 0.0
      %829 = vmatmul.mubr.f32.gmra.mrb[0].mxu0 %v198
      %v830 = vpop.f32.mrb[0].mxu0
      %v831 = vadd.f32 %v194, %v830
      %v832 = vpop.f32.mrb[0].mxu0
      %v833 = vadd.f32 %v194, %v832
      %834 = vdwg.mxu0
      %v835 = vmax.f32 %v831, 0.0
      %v836 = vmax.f32 %v833, 0.0
      %s837 = scalar_lea.vmem %s177, 96
      %838 = vst [vmem:[%s837] sm:$0xff] %v835
      %839 = vst [vmem:[%s837 + $0x8] sm:$0xff] %v836
      %s840 = scalar_lea.vmem %s170, 560
      %v841 = vld [vmem:[%s840] sm:$0xff]
      %v842 = vld [vmem:[%s840 + $0x8] sm:$0xff]
      %v843 = vld [vmem:[%s840 + $0x10] sm:$0xff]
      %v844 = vld [vmem:[%s840 + $0x18] sm:$0xff]
      %v845 = vld [vmem:[%s840 + $0x20] sm:$0xff]
      %v846 = vld [vmem:[%s840 + $0x28] sm:$0xff]
      %v847 = vld [vmem:[%s840 + $0x30] sm:$0xff]
      %v848 = vld [vmem:[%s840 + $0x38] sm:$0xff]
      %v849 = vld [vmem:[%s840 + $0x40] sm:$0xf]
      %v850 = vld [vmem:[%s840 + $0x48] sm:$0xf]
      %v852 = vsel %vm200, %v849, 0
      %v855 = vsel %vm200, %v850, 0
      %857 = vmatprep.subr.mxu0 %v842
      %858 = vmatpush1.msra.mxu0 %v841
      %859 = vmatprep.subr.mxu0 %v844
      %860 = vmatpush1.msra.mxu0 %v843
      %861 = vmatprep.subr.mxu0 %v846
      %862 = vmatpush1.msra.mxu0 %v845
      %863 = vmatprep.subr.mxu0 %v848
      %864 = vmatpush1.msra.mxu0 %v847
      %865 = vmatprep.subr.mxu0 %v855
      %866 = vmatpush1.msra.mxu0 %v852
      %867 = vmatprep.subr.mxu0 0.0
      %868 = vmatpush1.msra.mxu0 0.0
      %869 = vmatprep.subr.mxu0 0.0
      %870 = vmatpush1.msra.mxu0 0.0
      %871 = vmatprep.subr.mxu0 0.0
      %872 = vmatpush1.msra.mxu0 0.0
      %873 = vmatprep.subr.mxu0 0.0
      %874 = vmatpush1.msra.mxu0 0.0
      %875 = vmatprep.subr.mxu0 0.0
      %876 = vmatpush1.msra.mxu0 0.0
      %877 = vmatprep.subr.mxu0 0.0
      %878 = vmatpush1.msra.mxu0 0.0
      %879 = vmatprep.subr.mxu0 0.0
      %880 = vmatpush1.msra.mxu0 0.0
      %881 = vmatprep.subr.mxu0 0.0
      %882 = vmatpush1.msra.mxu0 0.0
      %883 = vmatprep.subr.mxu0 0.0
      %884 = vmatpush1.msra.mxu0 0.0
      %885 = vmatprep.subr.mxu0 0.0
      %886 = vmatpush1.msra.mxu0 0.0
      %887 = vmatprep.subr.mxu0 0.0
      %888 = vmatpush1.msra.mxu0 0.0
      %889 = vmatprep.subr.mxu0 0.0
      %890 = vmatpush1.msra.mxu0 0.0
      %891 = vmatprep.subr.mxu0 0.0
      %892 = vmatpush1.msra.mxu0 0.0
      %893 = vmatprep.subr.mxu0 0.0
      %894 = vmatpush1.msra.mxu0 0.0
      %895 = vmatprep.subr.mxu0 0.0
      %896 = vmatpush1.msra.mxu0 0.0
      %897 = vmatprep.subr.mxu0 0.0
      %898 = vmatpush1.msra.mxu0 0.0
      %899 = vmatprep.subr.mxu0 0.0
      %900 = vmatpush1.msra.mxu0 0.0
      %901 = vmatprep.subr.mxu0 0.0
      %902 = vmatpush1.msra.mxu0 0.0
      %903 = vmatprep.subr.mxu0 0.0
      %904 = vmatpush1.msra.mxu0 0.0
      %905 = vmatprep.subr.mxu0 0.0
      %906 = vmatpush1.msra.mxu0 0.0
      %907 = vmatprep.subr.mxu0 0.0
      %908 = vmatpush1.msra.mxu0 0.0
      %909 = vmatprep.subr.mxu0 0.0
      %910 = vmatpush1.msra.mxu0 0.0
      %911 = vmatprep.subr.mxu0 0.0
      %912 = vmatpush1.msra.mxu0 0.0
      %913 = vmatprep.subr.mxu0 0.0
      %914 = vmatpush1.msra.mxu0 0.0
      %915 = vmatprep.subr.mxu0 0.0
      %916 = vmatpush1.msra.mxu0 0.0
      %917 = vmatprep.subr.mxu0 0.0
      %918 = vmatpush1.msra.mxu0 0.0
      %919 = vmatprep.subr.mxu0 0.0
      %920 = vmatpush1.msra.mxu0 0.0
      %921 = vmatprep.mubr.f32.mxu0 0.0
      %922 = vmatmul.mubr.f32.gmra.mrb[0].mxu0 %v198
      %v923 = vpop.f32.mrb[0].mxu0
      %v924 = vadd.f32 %v194, %v923
      %v925 = vpop.f32.mrb[0].mxu0
      %v926 = vadd.f32 %v194, %v925
      %927 = vdwg.mxu0
      %v928 = vmax.f32 %v924, 0.0
      %v929 = vmax.f32 %v926, 0.0
      %s930 = scalar_lea.vmem %s177, 112
      %931 = vst [vmem:[%s930] sm:$0xff] %v928
      %932 = vst [vmem:[%s930 + $0x8] sm:$0xff] %v929
      %s933 = smul.u32 8, %s14
      %p934 = scmp.lt.s32.totalorder %s933, 15
      %s935 = scalar_select %p934, %s933, 15
      %s936 = smul.addr %s935, 2
      %s937 = smul.addr %s936, 8
      %s938 = scalar_lea.vmem %s3, %s937
      // Predicated region
      $region33: #{cnn_lstm_state_forward.3} parent=31 // pred_check
        %p939 = pneg %p100
      $region34: #{cnn_lstm_state_forward.3} parent=31 // pred_check_branch
        %941 = sbr.rel (%p939) target = $region36
      $region35: #{cnn_lstm_state_forward.3} parent=31 // pred_region
        %s942 = smul.u32 8, %s14
      $region36: #{cnn_lstm_state_forward.3} parent=31 // pred_fallthru
        _
    $region32: #{cnn_lstm_state_forward.3} parent=5 // pred_fallthru
      _
    %p943 = scmp.le.s32.totalorder 2, %s9
    // Predicated region
    $region37: #{cnn_lstm_state_forward.3} parent=5 // pred_check
      %p944 = pneg %p943
    $region38: #{cnn_lstm_state_forward.3} parent=5 // pred_check_branch
      %946 = sbr.rel (%p944) target = $region40
    $region39: #{cnn_lstm_state_forward.3} parent=5 // pred_region
      %s947 = ssub.s32 %s9, 2
      // Predicated region
      $region41: #{cnn_lstm_state_forward.3} parent=39 // pred_check
        %p948 = pneg %p106
      $region42: #{cnn_lstm_state_forward.3} parent=39 // pred_check_branch
        %950 = sbr.rel (%p948) target = $region44
      $region43: #{cnn_lstm_state_forward.3} parent=39 // pred_region
        %s951 = smul.u32 8, %s15
        %p952 = scmp.lt.s32.totalorder %s951, 15
        %s953 = scalar_select %p952, %s951, 15
        %s954 = smul.addr %s953, 2
        %s955 = smul.addr %s954, 8
        %s956 = scalar_lea.vmem %s3, %s955
      $region44: #{cnn_lstm_state_forward.3} parent=39 // pred_fallthru
        _
    $region40: #{cnn_lstm_state_forward.3} parent=5 // pred_fallthru
      _
  $region6: #{cnn_lstm_state_forward.3} parent=0 // loop_footer
    %s13 = sadd.s32 1, %s9
  $region7: #{cnn_lstm_state_forward.3} parent=0 // loop_footer_branch
    %8 = sbr.rel target = $region3
  $region8: #{cnn_lstm_state_forward.3} parent=0 // loop_exit
    _

// kernel: cnn_lstm_state_forward.4
$region0: #{cnn_lstm_state_forward.4}
  #allocation0 [shape = 'u32[]', space=smem, size = 0x4, offset = 0x4, fixed_abs, tag = 'smem constant byte address 0x4 - core index']
  #allocation1 [shape = 'u32[144,128]{1,0:T(1,128)}', space=vmem, size = 0x12000, scoped, tag = 'internal scratch']
  %s0 = inlined_call_operand.vmem [shape: f32[16,2048], index: 0, kind: input, shape index: {}]
  %s1 = inlined_call_operand.vmem [shape: f32[2048,128], index: 1, kind: input, shape index: {}]
  %s2 = inlined_call_operand.vmem [shape: f32[1,128], index: 2, kind: input, shape index: {}]
  %s3 = inlined_call_operand.vmem [shape: f32[16,128], index: 3, kind: output, shape index: {}]
  %s4 = sld [smem:[#allocation0]]
  $region22: #{cnn_lstm_state_forward.4} parent=0
    _
  %s6 = ssub.s32 1, %s4
  %s7 = scalar_select 0, %s6, %s4
  // Predicated region
  $region2: #{cnn_lstm_state_forward.4} parent=0 // pred_check
    _
  $region3: #{cnn_lstm_state_forward.4} parent=0 // pred_check_branch
    %9 = sbr.rel (0) target = $region5
  $region4: #{cnn_lstm_state_forward.4} parent=0 // pred_region
    _
  $region5: #{cnn_lstm_state_forward.4} parent=0 // pred_fallthru
    _
  // Predicated region
  $region6: #{cnn_lstm_state_forward.4} parent=0 // pred_check
    _
  $region7: #{cnn_lstm_state_forward.4} parent=0 // pred_check_branch
    %11 = sbr.rel (0) target = $region9
  $region8: #{cnn_lstm_state_forward.4} parent=0 // pred_region
    _
  $region9: #{cnn_lstm_state_forward.4} parent=0 // pred_fallthru
    _
  // Predicated region
  $region10: #{cnn_lstm_state_forward.4} parent=0 // pred_check
    _
  $region11: #{cnn_lstm_state_forward.4} parent=0 // pred_check_branch
    %13 = sbr.rel (0) target = $region13
  $region12: #{cnn_lstm_state_forward.4} parent=0 // pred_region
    _
  $region13: #{cnn_lstm_state_forward.4} parent=0 // pred_fallthru
    _
  %v14 = vld [vmem:[%s0] sm:$0xff]
  %v15 = vld [vmem:[%s0 + $0x8] sm:$0xff]
  %v16 = vld [vmem:[%s0 + $0x10] sm:$0xff]
  %v17 = vld [vmem:[%s0 + $0x18] sm:$0xff]
  %v18 = vld [vmem:[%s0 + $0x20] sm:$0xff]
  %v19 = vld [vmem:[%s0 + $0x28] sm:$0xff]
  %v20 = vld [vmem:[%s0 + $0x30] sm:$0xff]
  %v21 = vld [vmem:[%s0 + $0x38] sm:$0xff]
  %v22 = vld [vmem:[%s0 + $0x40] sm:$0xff]
  %v23 = vld [vmem:[%s0 + $0x48] sm:$0xff]
  %v24 = vld [vmem:[%s0 + $0x50] sm:$0xff]
  %v25 = vld [vmem:[%s0 + $0x58] sm:$0xff]
  %v26 = vld [vmem:[%s0 + $0x60] sm:$0xff]
  %v27 = vld [vmem:[%s0 + $0x68] sm:$0xff]
  %v28 = vld [vmem:[%s0 + $0x70] sm:$0xff]
  %v29 = vld [vmem:[%s0 + $0x78] sm:$0xff]
  %v30 = vld [vmem:[%s0 + $0x80] sm:$0xff]
  %v31 = vld [vmem:[%s0 + $0x88] sm:$0xff]
  %v32 = vld [vmem:[%s0 + $0x90] sm:$0xff]
  %v33 = vld [vmem:[%s0 + $0x98] sm:$0xff]
  %v34 = vld [vmem:[%s0 + $0xa0] sm:$0xff]
  %v35 = vld [vmem:[%s0 + $0xa8] sm:$0xff]
  %v36 = vld [vmem:[%s0 + $0xb0] sm:$0xff]
  %v37 = vld [vmem:[%s0 + $0xb8] sm:$0xff]
  %v38 = vld [vmem:[%s0 + $0xc0] sm:$0xff]
  %v39 = vld [vmem:[%s0 + $0xc8] sm:$0xff]
  %v40 = vld [vmem:[%s0 + $0xd0] sm:$0xff]
  %v41 = vld [vmem:[%s0 + $0xd8] sm:$0xff]
  %v42 = vld [vmem:[%s0 + $0xe0] sm:$0xff]
  %v43 = vld [vmem:[%s0 + $0xe8] sm:$0xff]
  %v44 = vld [vmem:[%s0 + $0xf0] sm:$0xff]
  %v45 = vld [vmem:[%s0 + $0xf8] sm:$0xff]
  %v46 = vld [vmem:[%s1] sm:$0xff]
  %v47 = vld [vmem:[%s1 + $0x8] sm:$0xff]
  %v48 = vld [vmem:[%s1 + $0x10] sm:$0xff]
  %v49 = vld [vmem:[%s1 + $0x18] sm:$0xff]
  %v50 = vld [vmem:[%s1 + $0x20] sm:$0xff]
  %v51 = vld [vmem:[%s1 + $0x28] sm:$0xff]
  %v52 = vld [vmem:[%s1 + $0x30] sm:$0xff]
  %v53 = vld [vmem:[%s1 + $0x38] sm:$0xff]
  %v54 = vld [vmem:[%s1 + $0x40] sm:$0xff]
  %v55 = vld [vmem:[%s1 + $0x48] sm:$0xff]
  %v56 = vld [vmem:[%s1 + $0x50] sm:$0xff]
  %v57 = vld [vmem:[%s1 + $0x58] sm:$0xff]
  %v58 = vld [vmem:[%s1 + $0x60] sm:$0xff]
  %v59 = vld [vmem:[%s1 + $0x68] sm:$0xff]
  %v60 = vld [vmem:[%s1 + $0x70] sm:$0xff]
  %v61 = vld [vmem:[%s1 + $0x78] sm:$0xff]
  %v62 = vld [vmem:[%s1 + $0x80] sm:$0xff]
  %v63 = vld [vmem:[%s1 + $0x88] sm:$0xff]
  %v64 = vld [vmem:[%s1 + $0x90] sm:$0xff]
  %v65 = vld [vmem:[%s1 + $0x98] sm:$0xff]
  %v66 = vld [vmem:[%s1 + $0xa0] sm:$0xff]
  %v67 = vld [vmem:[%s1 + $0xa8] sm:$0xff]
  %v68 = vld [vmem:[%s1 + $0xb0] sm:$0xff]
  %v69 = vld [vmem:[%s1 + $0xb8] sm:$0xff]
  %v70 = vld [vmem:[%s1 + $0xc0] sm:$0xff]
  %v71 = vld [vmem:[%s1 + $0xc8] sm:$0xff]
  %v72 = vld [vmem:[%s1 + $0xd0] sm:$0xff]
  %v73 = vld [vmem:[%s1 + $0xd8] sm:$0xff]
  %v74 = vld [vmem:[%s1 + $0xe0] sm:$0xff]
  %v75 = vld [vmem:[%s1 + $0xe8] sm:$0xff]
  %v76 = vld [vmem:[%s1 + $0xf0] sm:$0xff]
  %v77 = vld [vmem:[%s1 + $0xf8] sm:$0xff]
  %v78 = vld [vmem:[%s1 + $0x100] sm:$0xff]
  %v79 = vld [vmem:[%s1 + $0x108] sm:$0xff]
  %v80 = vld [vmem:[%s1 + $0x110] sm:$0xff]
  %v81 = vld [vmem:[%s1 + $0x118] sm:$0xff]
  %v82 = vld [vmem:[%s1 + $0x120] sm:$0xff]
  %v83 = vld [vmem:[%s1 + $0x128] sm:$0xff]
  %v84 = vld [vmem:[%s1 + $0x130] sm:$0xff]
  %v85 = vld [vmem:[%s1 + $0x138] sm:$0xff]
  %v86 = vld [vmem:[%s1 + $0x140] sm:$0xff]
  %v87 = vld [vmem:[%s1 + $0x148] sm:$0xff]
  %v88 = vld [vmem:[%s1 + $0x150] sm:$0xff]
  %v89 = vld [vmem:[%s1 + $0x158] sm:$0xff]
  %v90 = vld [vmem:[%s1 + $0x160] sm:$0xff]
  %v91 = vld [vmem:[%s1 + $0x168] sm:$0xff]
  %v92 = vld [vmem:[%s1 + $0x170] sm:$0xff]
  %v93 = vld [vmem:[%s1 + $0x178] sm:$0xff]
  %v94 = vld [vmem:[%s1 + $0x180] sm:$0xff]
  %v95 = vld [vmem:[%s1 + $0x188] sm:$0xff]
  %v96 = vld [vmem:[%s1 + $0x190] sm:$0xff]
  %v97 = vld [vmem:[%s1 + $0x198] sm:$0xff]
  %v98 = vld [vmem:[%s1 + $0x1a0] sm:$0xff]
  %v99 = vld [vmem:[%s1 + $0x1a8] sm:$0xff]
  %v100 = vld [vmem:[%s1 + $0x1b0] sm:$0xff]
  %v101 = vld [vmem:[%s1 + $0x1b8] sm:$0xff]
  %v102 = vld [vmem:[%s1 + $0x1c0] sm:$0xff]
  %v103 = vld [vmem:[%s1 + $0x1c8] sm:$0xff]
  %v104 = vld [vmem:[%s1 + $0x1d0] sm:$0xff]
  %v105 = vld [vmem:[%s1 + $0x1d8] sm:$0xff]
  %v106 = vld [vmem:[%s1 + $0x1e0] sm:$0xff]
  %v107 = vld [vmem:[%s1 + $0x1e8] sm:$0xff]
  %v108 = vld [vmem:[%s1 + $0x1f0] sm:$0xff]
  %v109 = vld [vmem:[%s1 + $0x1f8] sm:$0xff]
  %v110 = vld [vmem:[%s1 + $0x200] sm:$0xff]
  %v111 = vld [vmem:[%s1 + $0x208] sm:$0xff]
  %v112 = vld [vmem:[%s1 + $0x210] sm:$0xff]
  %v113 = vld [vmem:[%s1 + $0x218] sm:$0xff]
  %v114 = vld [vmem:[%s1 + $0x220] sm:$0xff]
  %v115 = vld [vmem:[%s1 + $0x228] sm:$0xff]
  %v116 = vld [vmem:[%s1 + $0x230] sm:$0xff]
  %v117 = vld [vmem:[%s1 + $0x238] sm:$0xff]
  %v118 = vld [vmem:[%s1 + $0x240] sm:$0xff]
  %v119 = vld [vmem:[%s1 + $0x248] sm:$0xff]
  %v120 = vld [vmem:[%s1 + $0x250] sm:$0xff]
  %v121 = vld [vmem:[%s1 + $0x258] sm:$0xff]
  %v122 = vld [vmem:[%s1 + $0x260] sm:$0xff]
  %v123 = vld [vmem:[%s1 + $0x268] sm:$0xff]
  %v124 = vld [vmem:[%s1 + $0x270] sm:$0xff]
  %v125 = vld [vmem:[%s1 + $0x278] sm:$0xff]
  %v126 = vld [vmem:[%s1 + $0x280] sm:$0xff]
  %v127 = vld [vmem:[%s1 + $0x288] sm:$0xff]
  %v128 = vld [vmem:[%s1 + $0x290] sm:$0xff]
  %v129 = vld [vmem:[%s1 + $0x298] sm:$0xff]
  %v130 = vld [vmem:[%s1 + $0x2a0] sm:$0xff]
  %v131 = vld [vmem:[%s1 + $0x2a8] sm:$0xff]
  %v132 = vld [vmem:[%s1 + $0x2b0] sm:$0xff]
  %v133 = vld [vmem:[%s1 + $0x2b8] sm:$0xff]
  %v134 = vld [vmem:[%s1 + $0x2c0] sm:$0xff]
  %v135 = vld [vmem:[%s1 + $0x2c8] sm:$0xff]
  %v136 = vld [vmem:[%s1 + $0x2d0] sm:$0xff]
  %v137 = vld [vmem:[%s1 + $0x2d8] sm:$0xff]
  %v138 = vld [vmem:[%s1 + $0x2e0] sm:$0xff]
  %v139 = vld [vmem:[%s1 + $0x2e8] sm:$0xff]
  %v140 = vld [vmem:[%s1 + $0x2f0] sm:$0xff]
  %v141 = vld [vmem:[%s1 + $0x2f8] sm:$0xff]
  %v142 = vld [vmem:[%s1 + $0x300] sm:$0xff]
  %v143 = vld [vmem:[%s1 + $0x308] sm:$0xff]
  %v144 = vld [vmem:[%s1 + $0x310] sm:$0xff]
  %v145 = vld [vmem:[%s1 + $0x318] sm:$0xff]
  %v146 = vld [vmem:[%s1 + $0x320] sm:$0xff]
  %v147 = vld [vmem:[%s1 + $0x328] sm:$0xff]
  %v148 = vld [vmem:[%s1 + $0x330] sm:$0xff]
  %v149 = vld [vmem:[%s1 + $0x338] sm:$0xff]
  %v150 = vld [vmem:[%s1 + $0x340] sm:$0xff]
  %v151 = vld [vmem:[%s1 + $0x348] sm:$0xff]
  %v152 = vld [vmem:[%s1 + $0x350] sm:$0xff]
  %v153 = vld [vmem:[%s1 + $0x358] sm:$0xff]
  %v154 = vld [vmem:[%s1 + $0x360] sm:$0xff]
  %v155 = vld [vmem:[%s1 + $0x368] sm:$0xff]
  %v156 = vld [vmem:[%s1 + $0x370] sm:$0xff]
  %v157 = vld [vmem:[%s1 + $0x378] sm:$0xff]
  %v158 = vld [vmem:[%s1 + $0x380] sm:$0xff]
  %v159 = vld [vmem:[%s1 + $0x388] sm:$0xff]
  %v160 = vld [vmem:[%s1 + $0x390] sm:$0xff]
  %v161 = vld [vmem:[%s1 + $0x398] sm:$0xff]
  %v162 = vld [vmem:[%s1 + $0x3a0] sm:$0xff]
  %v163 = vld [vmem:[%s1 + $0x3a8] sm:$0xff]
  %v164 = vld [vmem:[%s1 + $0x3b0] sm:$0xff]
  %v165 = vld [vmem:[%s1 + $0x3b8] sm:$0xff]
  %v166 = vld [vmem:[%s1 + $0x3c0] sm:$0xff]
  %v167 = vld [vmem:[%s1 + $0x3c8] sm:$0xff]
  %v168 = vld [vmem:[%s1 + $0x3d0] sm:$0xff]
  %v169 = vld [vmem:[%s1 + $0x3d8] sm:$0xff]
  %v170 = vld [vmem:[%s1 + $0x3e0] sm:$0xff]
  %v171 = vld [vmem:[%s1 + $0x3e8] sm:$0xff]
  %v172 = vld [vmem:[%s1 + $0x3f0] sm:$0xff]
  %v173 = vld [vmem:[%s1 + $0x3f8] sm:$0xff]
  %v174 = vld [vmem:[%s1 + $0x400] sm:$0xff]
  %v175 = vld [vmem:[%s1 + $0x408] sm:$0xff]
  %v176 = vld [vmem:[%s1 + $0x410] sm:$0xff]
  %v177 = vld [vmem:[%s1 + $0x418] sm:$0xff]
  %v178 = vld [vmem:[%s1 + $0x420] sm:$0xff]
  %v179 = vld [vmem:[%s1 + $0x428] sm:$0xff]
  %v180 = vld [vmem:[%s1 + $0x430] sm:$0xff]
  %v181 = vld [vmem:[%s1 + $0x438] sm:$0xff]
  %v182 = vld [vmem:[%s1 + $0x440] sm:$0xff]
  %v183 = vld [vmem:[%s1 + $0x448] sm:$0xff]
  %v184 = vld [vmem:[%s1 + $0x450] sm:$0xff]
  %v185 = vld [vmem:[%s1 + $0x458] sm:$0xff]
  %v186 = vld [vmem:[%s1 + $0x460] sm:$0xff]
  %v187 = vld [vmem:[%s1 + $0x468] sm:$0xff]
  %v188 = vld [vmem:[%s1 + $0x470] sm:$0xff]
  %v189 = vld [vmem:[%s1 + $0x478] sm:$0xff]
  %v190 = vld [vmem:[%s1 + $0x480] sm:$0xff]
  %v191 = vld [vmem:[%s1 + $0x488] sm:$0xff]
  %v192 = vld [vmem:[%s1 + $0x490] sm:$0xff]
  %v193 = vld [vmem:[%s1 + $0x498] sm:$0xff]
  %v194 = vld [vmem:[%s1 + $0x4a0] sm:$0xff]
  %v195 = vld [vmem:[%s1 + $0x4a8] sm:$0xff]
  %v196 = vld [vmem:[%s1 + $0x4b0] sm:$0xff]
  %v197 = vld [vmem:[%s1 + $0x4b8] sm:$0xff]
  %v198 = vld [vmem:[%s1 + $0x4c0] sm:$0xff]
  %v199 = vld [vmem:[%s1 + $0x4c8] sm:$0xff]
  %v200 = vld [vmem:[%s1 + $0x4d0] sm:$0xff]
  %v201 = vld [vmem:[%s1 + $0x4d8] sm:$0xff]
  %v202 = vld [vmem:[%s1 + $0x4e0] sm:$0xff]
  %v203 = vld [vmem:[%s1 + $0x4e8] sm:$0xff]
  %v204 = vld [vmem:[%s1 + $0x4f0] sm:$0xff]
  %v205 = vld [vmem:[%s1 + $0x4f8] sm:$0xff]
  %v206 = vld [vmem:[%s1 + $0x500] sm:$0xff]
  %v207 = vld [vmem:[%s1 + $0x508] sm:$0xff]
  %v208 = vld [vmem:[%s1 + $0x510] sm:$0xff]
  %v209 = vld [vmem:[%s1 + $0x518] sm:$0xff]
  %v210 = vld [vmem:[%s1 + $0x520] sm:$0xff]
  %v211 = vld [vmem:[%s1 + $0x528] sm:$0xff]
  %v212 = vld [vmem:[%s1 + $0x530] sm:$0xff]
  %v213 = vld [vmem:[%s1 + $0x538] sm:$0xff]
  %v214 = vld [vmem:[%s1 + $0x540] sm:$0xff]
  %v215 = vld [vmem:[%s1 + $0x548] sm:$0xff]
  %v216 = vld [vmem:[%s1 + $0x550] sm:$0xff]
  %v217 = vld [vmem:[%s1 + $0x558] sm:$0xff]
  %v218 = vld [vmem:[%s1 + $0x560] sm:$0xff]
  %v219 = vld [vmem:[%s1 + $0x568] sm:$0xff]
  %v220 = vld [vmem:[%s1 + $0x570] sm:$0xff]
  %v221 = vld [vmem:[%s1 + $0x578] sm:$0xff]
  %v222 = vld [vmem:[%s1 + $0x580] sm:$0xff]
  %v223 = vld [vmem:[%s1 + $0x588] sm:$0xff]
  %v224 = vld [vmem:[%s1 + $0x590] sm:$0xff]
  %v225 = vld [vmem:[%s1 + $0x598] sm:$0xff]
  %v226 = vld [vmem:[%s1 + $0x5a0] sm:$0xff]
  %v227 = vld [vmem:[%s1 + $0x5a8] sm:$0xff]
  %v228 = vld [vmem:[%s1 + $0x5b0] sm:$0xff]
  %v229 = vld [vmem:[%s1 + $0x5b8] sm:$0xff]
  %v230 = vld [vmem:[%s1 + $0x5c0] sm:$0xff]
  %v231 = vld [vmem:[%s1 + $0x5c8] sm:$0xff]
  %v232 = vld [vmem:[%s1 + $0x5d0] sm:$0xff]
  %v233 = vld [vmem:[%s1 + $0x5d8] sm:$0xff]
  %v234 = vld [vmem:[%s1 + $0x5e0] sm:$0xff]
  %v235 = vld [vmem:[%s1 + $0x5e8] sm:$0xff]
  %v236 = vld [vmem:[%s1 + $0x5f0] sm:$0xff]
  %v237 = vld [vmem:[%s1 + $0x5f8] sm:$0xff]
  %v238 = vld [vmem:[%s1 + $0x600] sm:$0xff]
  %v239 = vld [vmem:[%s1 + $0x608] sm:$0xff]
  %v240 = vld [vmem:[%s1 + $0x610] sm:$0xff]
  %v241 = vld [vmem:[%s1 + $0x618] sm:$0xff]
  %v242 = vld [vmem:[%s1 + $0x620] sm:$0xff]
  %v243 = vld [vmem:[%s1 + $0x628] sm:$0xff]
  %v244 = vld [vmem:[%s1 + $0x630] sm:$0xff]
  %v245 = vld [vmem:[%s1 + $0x638] sm:$0xff]
  %v246 = vld [vmem:[%s1 + $0x640] sm:$0xff]
  %v247 = vld [vmem:[%s1 + $0x648] sm:$0xff]
  %v248 = vld [vmem:[%s1 + $0x650] sm:$0xff]
  %v249 = vld [vmem:[%s1 + $0x658] sm:$0xff]
  %v250 = vld [vmem:[%s1 + $0x660] sm:$0xff]
  %v251 = vld [vmem:[%s1 + $0x668] sm:$0xff]
  %v252 = vld [vmem:[%s1 + $0x670] sm:$0xff]
  %v253 = vld [vmem:[%s1 + $0x678] sm:$0xff]
  %v254 = vld [vmem:[%s1 + $0x680] sm:$0xff]
  %v255 = vld [vmem:[%s1 + $0x688] sm:$0xff]
  %v256 = vld [vmem:[%s1 + $0x690] sm:$0xff]
  %v257 = vld [vmem:[%s1 + $0x698] sm:$0xff]
  %v258 = vld [vmem:[%s1 + $0x6a0] sm:$0xff]
  %v259 = vld [vmem:[%s1 + $0x6a8] sm:$0xff]
  %v260 = vld [vmem:[%s1 + $0x6b0] sm:$0xff]
  %v261 = vld [vmem:[%s1 + $0x6b8] sm:$0xff]
  %v262 = vld [vmem:[%s1 + $0x6c0] sm:$0xff]
  %v263 = vld [vmem:[%s1 + $0x6c8] sm:$0xff]
  %v264 = vld [vmem:[%s1 + $0x6d0] sm:$0xff]
  %v265 = vld [vmem:[%s1 + $0x6d8] sm:$0xff]
  %v266 = vld [vmem:[%s1 + $0x6e0] sm:$0xff]
  %v267 = vld [vmem:[%s1 + $0x6e8] sm:$0xff]
  %v268 = vld [vmem:[%s1 + $0x6f0] sm:$0xff]
  %v269 = vld [vmem:[%s1 + $0x6f8] sm:$0xff]
  %v270 = vld [vmem:[%s1 + $0x700] sm:$0xff]
  %v271 = vld [vmem:[%s1 + $0x708] sm:$0xff]
  %v272 = vld [vmem:[%s1 + $0x710] sm:$0xff]
  %v273 = vld [vmem:[%s1 + $0x718] sm:$0xff]
  %v274 = vld [vmem:[%s1 + $0x720] sm:$0xff]
  %v275 = vld [vmem:[%s1 + $0x728] sm:$0xff]
  %v276 = vld [vmem:[%s1 + $0x730] sm:$0xff]
  %v277 = vld [vmem:[%s1 + $0x738] sm:$0xff]
  %v278 = vld [vmem:[%s1 + $0x740] sm:$0xff]
  %v279 = vld [vmem:[%s1 + $0x748] sm:$0xff]
  %v280 = vld [vmem:[%s1 + $0x750] sm:$0xff]
  %v281 = vld [vmem:[%s1 + $0x758] sm:$0xff]
  %v282 = vld [vmem:[%s1 + $0x760] sm:$0xff]
  %v283 = vld [vmem:[%s1 + $0x768] sm:$0xff]
  %v284 = vld [vmem:[%s1 + $0x770] sm:$0xff]
  %v285 = vld [vmem:[%s1 + $0x778] sm:$0xff]
  %v286 = vld [vmem:[%s1 + $0x780] sm:$0xff]
  %v287 = vld [vmem:[%s1 + $0x788] sm:$0xff]
  %v288 = vld [vmem:[%s1 + $0x790] sm:$0xff]
  %v289 = vld [vmem:[%s1 + $0x798] sm:$0xff]
  %v290 = vld [vmem:[%s1 + $0x7a0] sm:$0xff]
  %v291 = vld [vmem:[%s1 + $0x7a8] sm:$0xff]
  %v292 = vld [vmem:[%s1 + $0x7b0] sm:$0xff]
  %v293 = vld [vmem:[%s1 + $0x7b8] sm:$0xff]
  %v294 = vld [vmem:[%s1 + $0x7c0] sm:$0xff]
  %v295 = vld [vmem:[%s1 + $0x7c8] sm:$0xff]
  %v296 = vld [vmem:[%s1 + $0x7d0] sm:$0xff]
  %v297 = vld [vmem:[%s1 + $0x7d8] sm:$0xff]
  %v298 = vld [vmem:[%s1 + $0x7e0] sm:$0xff]
  %v299 = vld [vmem:[%s1 + $0x7e8] sm:$0xff]
  %v300 = vld [vmem:[%s1 + $0x7f0] sm:$0xff]
  %v301 = vld [vmem:[%s1 + $0x7f8] sm:$0xff]
  %v302 = vld [vmem:[%s2] sm:$0x1]
  %v304 = vlaneseq
  %v305 = vshrl.u32 %v304, 7
  %v306 = vsub.s32 0, %v305
  %v307 = vrot.slane %v302, %v306
  %309 = vmatprep.subr.mxu0 0.0
  %310 = vmatpush1.msra.mxu0 %v46
  %311 = vmatprep.subr.mxu0 0.0
  %312 = vmatpush1.msra.mxu0 %v47
  %313 = vmatprep.subr.mxu0 0.0
  %314 = vmatpush1.msra.mxu0 %v48
  %315 = vmatprep.subr.mxu0 0.0
  %316 = vmatpush1.msra.mxu0 %v49
  %317 = vmatprep.subr.mxu0 0.0
  %318 = vmatpush1.msra.mxu0 %v50
  %319 = vmatprep.subr.mxu0 0.0
  %320 = vmatpush1.msra.mxu0 %v51
  %321 = vmatprep.subr.mxu0 0.0
  %322 = vmatpush1.msra.mxu0 %v52
  %323 = vmatprep.subr.mxu0 0.0
  %324 = vmatpush1.msra.mxu0 %v53
  %325 = vmatprep.subr.mxu0 0.0
  %326 = vmatpush1.msra.mxu0 %v54
  %327 = vmatprep.subr.mxu0 0.0
  %328 = vmatpush1.msra.mxu0 %v55
  %329 = vmatprep.subr.mxu0 0.0
  %330 = vmatpush1.msra.mxu0 %v56
  %331 = vmatprep.subr.mxu0 0.0
  %332 = vmatpush1.msra.mxu0 %v57
  %333 = vmatprep.subr.mxu0 0.0
  %334 = vmatpush1.msra.mxu0 %v58
  %335 = vmatprep.subr.mxu0 0.0
  %336 = vmatpush1.msra.mxu0 %v59
  %337 = vmatprep.subr.mxu0 0.0
  %338 = vmatpush1.msra.mxu0 %v60
  %339 = vmatprep.subr.mxu0 0.0
  %340 = vmatpush1.msra.mxu0 %v61
  %341 = vmatprep.subr.mxu0 0.0
  %342 = vmatpush1.msra.mxu0 %v62
  %343 = vmatprep.subr.mxu0 0.0
  %344 = vmatpush1.msra.mxu0 %v63
  %345 = vmatprep.subr.mxu0 0.0
  %346 = vmatpush1.msra.mxu0 %v64
  %347 = vmatprep.subr.mxu0 0.0
  %348 = vmatpush1.msra.mxu0 %v65
  %349 = vmatprep.subr.mxu0 0.0
  %350 = vmatpush1.msra.mxu0 %v66
  %351 = vmatprep.subr.mxu0 0.0
  %352 = vmatpush1.msra.mxu0 %v67
  %353 = vmatprep.subr.mxu0 0.0
  %354 = vmatpush1.msra.mxu0 %v68
  %355 = vmatprep.subr.mxu0 0.0
  %356 = vmatpush1.msra.mxu0 %v69
  %357 = vmatprep.subr.mxu0 0.0
  %358 = vmatpush1.msra.mxu0 %v70
  %359 = vmatprep.subr.mxu0 0.0
  %360 = vmatpush1.msra.mxu0 %v71
  %361 = vmatprep.subr.mxu0 0.0
  %362 = vmatpush1.msra.mxu0 %v72
  %363 = vmatprep.subr.mxu0 0.0
  %364 = vmatpush1.msra.mxu0 %v73
  %365 = vmatprep.subr.mxu0 0.0
  %366 = vmatpush1.msra.mxu0 %v74
  %367 = vmatprep.subr.mxu0 0.0
  %368 = vmatpush1.msra.mxu0 %v75
  %369 = vmatprep.subr.mxu0 0.0
  %370 = vmatpush1.msra.mxu0 %v76
  %371 = vmatprep.subr.mxu0 0.0
  %372 = vmatpush1.msra.mxu0 %v77
  %373 = vmatprep.mubr.f32.mxu0 %v15
  %374 = vmatmul.mubr.f32.gmra.mrb[0].mxu0 %v14
  %v375 = vpop.f32.mrb[0].mxu0
  %v376 = vadd.f32 %v307, %v375
  %v377 = vpop.f32.mrb[0].mxu0
  %378 = vmatprep.mubr.f32.mxu0 %v31
  %379 = vmatmul.mubr.f32.gmra.mrb[0].mxu0 %v30
  %v380 = vpop.f32.mrb[0].mxu0
  %v381 = vadd.f32 %v307, %v380
  %v382 = vpop.f32.mrb[0].mxu0
  %383 = vdwg.mxu0
  %384 = vmatprep.subr.mxu0 0.0
  %385 = vmatpush1.msra.mxu0 %v78
  %386 = vmatprep.subr.mxu0 0.0
  %387 = vmatpush1.msra.mxu0 %v79
  %388 = vmatprep.subr.mxu0 0.0
  %389 = vmatpush1.msra.mxu0 %v80
  %390 = vmatprep.subr.mxu0 0.0
  %391 = vmatpush1.msra.mxu0 %v81
  %392 = vmatprep.subr.mxu0 0.0
  %393 = vmatpush1.msra.mxu0 %v82
  %394 = vmatprep.subr.mxu0 0.0
  %395 = vmatpush1.msra.mxu0 %v83
  %396 = vmatprep.subr.mxu0 0.0
  %397 = vmatpush1.msra.mxu0 %v84
  %398 = vmatprep.subr.mxu0 0.0
  %399 = vmatpush1.msra.mxu0 %v85
  %400 = vmatprep.subr.mxu0 0.0
  %401 = vmatpush1.msra.mxu0 %v86
  %402 = vmatprep.subr.mxu0 0.0
  %403 = vmatpush1.msra.mxu0 %v87
  %404 = vmatprep.subr.mxu0 0.0
  %405 = vmatpush1.msra.mxu0 %v88
  %406 = vmatprep.subr.mxu0 0.0
  %407 = vmatpush1.msra.mxu0 %v89
  %408 = vmatprep.subr.mxu0 0.0
  %409 = vmatpush1.msra.mxu0 %v90
  %410 = vmatprep.subr.mxu0 0.0
  %411 = vmatpush1.msra.mxu0 %v91
  %412 = vmatprep.subr.mxu0 0.0
  %413 = vmatpush1.msra.mxu0 %v92
  %414 = vmatprep.subr.mxu0 0.0
  %415 = vmatpush1.msra.mxu0 %v93
  %416 = vmatprep.subr.mxu0 0.0
  %417 = vmatpush1.msra.mxu0 %v94
  %418 = vmatprep.subr.mxu0 0.0
  %419 = vmatpush1.msra.mxu0 %v95
  %420 = vmatprep.subr.mxu0 0.0
  %421 = vmatpush1.msra.mxu0 %v96
  %422 = vmatprep.subr.mxu0 0.0
  %423 = vmatpush1.msra.mxu0 %v97
  %424 = vmatprep.subr.mxu0 0.0
  %425 = vmatpush1.msra.mxu0 %v98
  %426 = vmatprep.subr.mxu0 0.0
  %427 = vmatpush1.msra.mxu0 %v99
  %428 = vmatprep.subr.mxu0 0.0
  %429 = vmatpush1.msra.mxu0 %v100
  %430 = vmatprep.subr.mxu0 0.0
  %431 = vmatpush1.msra.mxu0 %v101
  %432 = vmatprep.subr.mxu0 0.0
  %433 = vmatpush1.msra.mxu0 %v102
  %434 = vmatprep.subr.mxu0 0.0
  %435 = vmatpush1.msra.mxu0 %v103
  %436 = vmatprep.subr.mxu0 0.0
  %437 = vmatpush1.msra.mxu0 %v104
  %438 = vmatprep.subr.mxu0 0.0
  %439 = vmatpush1.msra.mxu0 %v105
  %440 = vmatprep.subr.mxu0 0.0
  %441 = vmatpush1.msra.mxu0 %v106
  %442 = vmatprep.subr.mxu0 0.0
  %443 = vmatpush1.msra.mxu0 %v107
  %444 = vmatprep.subr.mxu0 0.0
  %445 = vmatpush1.msra.mxu0 %v108
  %446 = vmatprep.subr.mxu0 0.0
  %447 = vmatpush1.msra.mxu0 %v109
  %448 = vmatprep.mubr.f32.mxu0 %v17
  %449 = vmatmul.mubr.f32.gmra.mrb[0].mxu0 %v16
  %v450 = vpop.f32.mrb[0].mxu0
  %v451 = vadd.f32 %v376, %v450
  %v452 = vpop.f32.mrb[0].mxu0
  %453 = vmatprep.mubr.f32.mxu0 %v33
  %454 = vmatmul.mubr.f32.gmra.mrb[0].mxu0 %v32
  %v455 = vpop.f32.mrb[0].mxu0
  %v456 = vadd.f32 %v381, %v455
  %v457 = vpop.f32.mrb[0].mxu0
  %458 = vdwg.mxu0
  %459 = vmatprep.subr.mxu0 0.0
  %460 = vmatpush1.msra.mxu0 %v110
  %461 = vmatprep.subr.mxu0 0.0
  %462 = vmatpush1.msra.mxu0 %v111
  %463 = vmatprep.subr.mxu0 0.0
  %464 = vmatpush1.msra.mxu0 %v112
  %465 = vmatprep.subr.mxu0 0.0
  %466 = vmatpush1.msra.mxu0 %v113
  %467 = vmatprep.subr.mxu0 0.0
  %468 = vmatpush1.msra.mxu0 %v114
  %469 = vmatprep.subr.mxu0 0.0
  %470 = vmatpush1.msra.mxu0 %v115
  %471 = vmatprep.subr.mxu0 0.0
  %472 = vmatpush1.msra.mxu0 %v116
  %473 = vmatprep.subr.mxu0 0.0
  %474 = vmatpush1.msra.mxu0 %v117
  %475 = vmatprep.subr.mxu0 0.0
  %476 = vmatpush1.msra.mxu0 %v118
  %477 = vmatprep.subr.mxu0 0.0
  %478 = vmatpush1.msra.mxu0 %v119
  %479 = vmatprep.subr.mxu0 0.0
  %480 = vmatpush1.msra.mxu0 %v120
  %481 = vmatprep.subr.mxu0 0.0
  %482 = vmatpush1.msra.mxu0 %v121
  %483 = vmatprep.subr.mxu0 0.0
  %484 = vmatpush1.msra.mxu0 %v122
  %485 = vmatprep.subr.mxu0 0.0
  %486 = vmatpush1.msra.mxu0 %v123
  %487 = vmatprep.subr.mxu0 0.0
  %488 = vmatpush1.msra.mxu0 %v124
  %489 = vmatprep.subr.mxu0 0.0
  %490 = vmatpush1.msra.mxu0 %v125
  %491 = vmatprep.subr.mxu0 0.0
  %492 = vmatpush1.msra.mxu0 %v126
  %493 = vmatprep.subr.mxu0 0.0
  %494 = vmatpush1.msra.mxu0 %v127
  %495 = vmatprep.subr.mxu0 0.0
  %496 = vmatpush1.msra.mxu0 %v128
  %497 = vmatprep.subr.mxu0 0.0
  %498 = vmatpush1.msra.mxu0 %v129
  %499 = vmatprep.subr.mxu0 0.0
  %500 = vmatpush1.msra.mxu0 %v130
  %501 = vmatprep.subr.mxu0 0.0
  %502 = vmatpush1.msra.mxu0 %v131
  %503 = vmatprep.subr.mxu0 0.0
  %504 = vmatpush1.msra.mxu0 %v132
  %505 = vmatprep.subr.mxu0 0.0
  %506 = vmatpush1.msra.mxu0 %v133
  %507 = vmatprep.subr.mxu0 0.0
  %508 = vmatpush1.msra.mxu0 %v134
  %509 = vmatprep.subr.mxu0 0.0
  %510 = vmatpush1.msra.mxu0 %v135
  %511 = vmatprep.subr.mxu0 0.0
  %512 = vmatpush1.msra.mxu0 %v136
  %513 = vmatprep.subr.mxu0 0.0
  %514 = vmatpush1.msra.mxu0 %v137
  %515 = vmatprep.subr.mxu0 0.0
  %516 = vmatpush1.msra.mxu0 %v138
  %517 = vmatprep.subr.mxu0 0.0
  %518 = vmatpush1.msra.mxu0 %v139
  %519 = vmatprep.subr.mxu0 0.0
  %520 = vmatpush1.msra.mxu0 %v140
  %521 = vmatprep.subr.mxu0 0.0
  %522 = vmatpush1.msra.mxu0 %v141
  %523 = vmatprep.mubr.f32.mxu0 %v19
  %524 = vmatmul.mubr.f32.gmra.mrb[0].mxu0 %v18
  %v525 = vpop.f32.mrb[0].mxu0
  %v526 = vadd.f32 %v451, %v525
  %v527 = vpop.f32.mrb[0].mxu0
  %528 = vmatprep.mubr.f32.mxu0 %v35
  %529 = vmatmul.mubr.f32.gmra.mrb[0].mxu0 %v34
  %v530 = vpop.f32.mrb[0].mxu0
  %v531 = vadd.f32 %v456, %v530
  %v532 = vpop.f32.mrb[0].mxu0
  %533 = vdwg.mxu0
  %534 = vmatprep.subr.mxu0 0.0
  %535 = vmatpush1.msra.mxu0 %v142
  %536 = vmatprep.subr.mxu0 0.0
  %537 = vmatpush1.msra.mxu0 %v143
  %538 = vmatprep.subr.mxu0 0.0
  %539 = vmatpush1.msra.mxu0 %v144
  %540 = vmatprep.subr.mxu0 0.0
  %541 = vmatpush1.msra.mxu0 %v145
  %542 = vmatprep.subr.mxu0 0.0
  %543 = vmatpush1.msra.mxu0 %v146
  %544 = vmatprep.subr.mxu0 0.0
  %545 = vmatpush1.msra.mxu0 %v147
  %546 = vmatprep.subr.mxu0 0.0
  %547 = vmatpush1.msra.mxu0 %v148
  %548 = vmatprep.subr.mxu0 0.0
  %549 = vmatpush1.msra.mxu0 %v149
  %550 = vmatprep.subr.mxu0 0.0
  %551 = vmatpush1.msra.mxu0 %v150
  %552 = vmatprep.subr.mxu0 0.0
  %553 = vmatpush1.msra.mxu0 %v151
  %554 = vmatprep.subr.mxu0 0.0
  %555 = vmatpush1.msra.mxu0 %v152
  %556 = vmatprep.subr.mxu0 0.0
  %557 = vmatpush1.msra.mxu0 %v153
  %558 = vmatprep.subr.mxu0 0.0
  %559 = vmatpush1.msra.mxu0 %v154
  %560 = vmatprep.subr.mxu0 0.0
  %561 = vmatpush1.msra.mxu0 %v155
  %562 = vmatprep.subr.mxu0 0.0
  %563 = vmatpush1.msra.mxu0 %v156
  %564 = vmatprep.subr.mxu0 0.0
  %565 = vmatpush1.msra.mxu0 %v157
  %566 = vmatprep.subr.mxu0 0.0
  %567 = vmatpush1.msra.mxu0 %v158
  %568 = vmatprep.subr.mxu0 0.0
  %569 = vmatpush1.msra.mxu0 %v159
  %570 = vmatprep.subr.mxu0 0.0
  %571 = vmatpush1.msra.mxu0 %v160
  %572 = vmatprep.subr.mxu0 0.0
  %573 = vmatpush1.msra.mxu0 %v161
  %574 = vmatprep.subr.mxu0 0.0
  %575 = vmatpush1.msra.mxu0 %v162
  %576 = vmatprep.subr.mxu0 0.0
  %577 = vmatpush1.msra.mxu0 %v163
  %578 = vmatprep.subr.mxu0 0.0
  %579 = vmatpush1.msra.mxu0 %v164
  %580 = vmatprep.subr.mxu0 0.0
  %581 = vmatpush1.msra.mxu0 %v165
  %582 = vmatprep.subr.mxu0 0.0
  %583 = vmatpush1.msra.mxu0 %v166
  %584 = vmatprep.subr.mxu0 0.0
  %585 = vmatpush1.msra.mxu0 %v167
  %586 = vmatprep.subr.mxu0 0.0
  %587 = vmatpush1.msra.mxu0 %v168
  %588 = vmatprep.subr.mxu0 0.0
  %589 = vmatpush1.msra.mxu0 %v169
  %590 = vmatprep.subr.mxu0 0.0
  %591 = vmatpush1.msra.mxu0 %v170
  %592 = vmatprep.subr.mxu0 0.0
  %593 = vmatpush1.msra.mxu0 %v171
  %594 = vmatprep.subr.mxu0 0.0
  %595 = vmatpush1.msra.mxu0 %v172
  %596 = vmatprep.subr.mxu0 0.0
  %597 = vmatpush1.msra.mxu0 %v173
  %598 = vmatprep.mubr.f32.mxu0 %v21
  %599 = vmatmul.mubr.f32.gmra.mrb[0].mxu0 %v20
  %v600 = vpop.f32.mrb[0].mxu0
  %v601 = vadd.f32 %v526, %v600
  %v602 = vpop.f32.mrb[0].mxu0
  %603 = vmatprep.mubr.f32.mxu0 %v37
  %604 = vmatmul.mubr.f32.gmra.mrb[0].mxu0 %v36
  %v605 = vpop.f32.mrb[0].mxu0
  %v606 = vadd.f32 %v531, %v605
  %v607 = vpop.f32.mrb[0].mxu0
  %608 = vdwg.mxu0
  %609 = vmatprep.subr.mxu0 0.0
  %610 = vmatpush1.msra.mxu0 %v174
  %611 = vmatprep.subr.mxu0 0.0
  %612 = vmatpush1.msra.mxu0 %v175
  %613 = vmatprep.subr.mxu0 0.0
  %614 = vmatpush1.msra.mxu0 %v176
  %615 = vmatprep.subr.mxu0 0.0
  %616 = vmatpush1.msra.mxu0 %v177
  %617 = vmatprep.subr.mxu0 0.0
  %618 = vmatpush1.msra.mxu0 %v178
  %619 = vmatprep.subr.mxu0 0.0
  %620 = vmatpush1.msra.mxu0 %v179
  %621 = vmatprep.subr.mxu0 0.0
  %622 = vmatpush1.msra.mxu0 %v180
  %623 = vmatprep.subr.mxu0 0.0
  %624 = vmatpush1.msra.mxu0 %v181
  %625 = vmatprep.subr.mxu0 0.0
  %626 = vmatpush1.msra.mxu0 %v182
  %627 = vmatprep.subr.mxu0 0.0
  %628 = vmatpush1.msra.mxu0 %v183
  %629 = vmatprep.subr.mxu0 0.0
  %630 = vmatpush1.msra.mxu0 %v184
  %631 = vmatprep.subr.mxu0 0.0
  %632 = vmatpush1.msra.mxu0 %v185
  %633 = vmatprep.subr.mxu0 0.0
  %634 = vmatpush1.msra.mxu0 %v186
  %635 = vmatprep.subr.mxu0 0.0
  %636 = vmatpush1.msra.mxu0 %v187
  %637 = vmatprep.subr.mxu0 0.0
  %638 = vmatpush1.msra.mxu0 %v188
  %639 = vmatprep.subr.mxu0 0.0
  %640 = vmatpush1.msra.mxu0 %v189
  %641 = vmatprep.subr.mxu0 0.0
  %642 = vmatpush1.msra.mxu0 %v190
  %643 = vmatprep.subr.mxu0 0.0
  %644 = vmatpush1.msra.mxu0 %v191
  %645 = vmatprep.subr.mxu0 0.0
  %646 = vmatpush1.msra.mxu0 %v192
  %647 = vmatprep.subr.mxu0 0.0
  %648 = vmatpush1.msra.mxu0 %v193
  %649 = vmatprep.subr.mxu0 0.0
  %650 = vmatpush1.msra.mxu0 %v194
  %651 = vmatprep.subr.mxu0 0.0
  %652 = vmatpush1.msra.mxu0 %v195
  %653 = vmatprep.subr.mxu0 0.0
  %654 = vmatpush1.msra.mxu0 %v196
  %655 = vmatprep.subr.mxu0 0.0
  %656 = vmatpush1.msra.mxu0 %v197
  %657 = vmatprep.subr.mxu0 0.0
  %658 = vmatpush1.msra.mxu0 %v198
  %659 = vmatprep.subr.mxu0 0.0
  %660 = vmatpush1.msra.mxu0 %v199
  %661 = vmatprep.subr.mxu0 0.0
  %662 = vmatpush1.msra.mxu0 %v200
  %663 = vmatprep.subr.mxu0 0.0
  %664 = vmatpush1.msra.mxu0 %v201
  %665 = vmatprep.subr.mxu0 0.0
  %666 = vmatpush1.msra.mxu0 %v202
  %667 = vmatprep.subr.mxu0 0.0
  %668 = vmatpush1.msra.mxu0 %v203
  %669 = vmatprep.subr.mxu0 0.0
  %670 = vmatpush1.msra.mxu0 %v204
  %671 = vmatprep.subr.mxu0 0.0
  %672 = vmatpush1.msra.mxu0 %v205
  %673 = vmatprep.mubr.f32.mxu0 %v23
  %674 = vmatmul.mubr.f32.gmra.mrb[0].mxu0 %v22
  %v675 = vpop.f32.mrb[0].mxu0
  %v676 = vadd.f32 %v601, %v675
  %v677 = vpop.f32.mrb[0].mxu0
  %678 = vmatprep.mubr.f32.mxu0 %v39
  %679 = vmatmul.mubr.f32.gmra.mrb[0].mxu0 %v38
  %v680 = vpop.f32.mrb[0].mxu0
  %v681 = vadd.f32 %v606, %v680
  %v682 = vpop.f32.mrb[0].mxu0
  %683 = vdwg.mxu0
  %684 = vmatprep.subr.mxu0 0.0
  %685 = vmatpush1.msra.mxu0 %v206
  %686 = vmatprep.subr.mxu0 0.0
  %687 = vmatpush1.msra.mxu0 %v207
  %688 = vmatprep.subr.mxu0 0.0
  %689 = vmatpush1.msra.mxu0 %v208
  %690 = vmatprep.subr.mxu0 0.0
  %691 = vmatpush1.msra.mxu0 %v209
  %692 = vmatprep.subr.mxu0 0.0
  %693 = vmatpush1.msra.mxu0 %v210
  %694 = vmatprep.subr.mxu0 0.0
  %695 = vmatpush1.msra.mxu0 %v211
  %696 = vmatprep.subr.mxu0 0.0
  %697 = vmatpush1.msra.mxu0 %v212
  %698 = vmatprep.subr.mxu0 0.0
  %699 = vmatpush1.msra.mxu0 %v213
  %700 = vmatprep.subr.mxu0 0.0
  %701 = vmatpush1.msra.mxu0 %v214
  %702 = vmatprep.subr.mxu0 0.0
  %703 = vmatpush1.msra.mxu0 %v215
  %704 = vmatprep.subr.mxu0 0.0
  %705 = vmatpush1.msra.mxu0 %v216
  %706 = vmatprep.subr.mxu0 0.0
  %707 = vmatpush1.msra.mxu0 %v217
  %708 = vmatprep.subr.mxu0 0.0
  %709 = vmatpush1.msra.mxu0 %v218
  %710 = vmatprep.subr.mxu0 0.0
  %711 = vmatpush1.msra.mxu0 %v219
  %712 = vmatprep.subr.mxu0 0.0
  %713 = vmatpush1.msra.mxu0 %v220
  %714 = vmatprep.subr.mxu0 0.0
  %715 = vmatpush1.msra.mxu0 %v221
  %716 = vmatprep.subr.mxu0 0.0
  %717 = vmatpush1.msra.mxu0 %v222
  %718 = vmatprep.subr.mxu0 0.0
  %719 = vmatpush1.msra.mxu0 %v223
  %720 = vmatprep.subr.mxu0 0.0
  %721 = vmatpush1.msra.mxu0 %v224
  %722 = vmatprep.subr.mxu0 0.0
  %723 = vmatpush1.msra.mxu0 %v225
  %724 = vmatprep.subr.mxu0 0.0
  %725 = vmatpush1.msra.mxu0 %v226
  %726 = vmatprep.subr.mxu0 0.0
  %727 = vmatpush1.msra.mxu0 %v227
  %728 = vmatprep.subr.mxu0 0.0
  %729 = vmatpush1.msra.mxu0 %v228
  %730 = vmatprep.subr.mxu0 0.0
  %731 = vmatpush1.msra.mxu0 %v229
  %732 = vmatprep.subr.mxu0 0.0
  %733 = vmatpush1.msra.mxu0 %v230
  %734 = vmatprep.subr.mxu0 0.0
  %735 = vmatpush1.msra.mxu0 %v231
  %736 = vmatprep.subr.mxu0 0.0
  %737 = vmatpush1.msra.mxu0 %v232
  %738 = vmatprep.subr.mxu0 0.0
  %739 = vmatpush1.msra.mxu0 %v233
  %740 = vmatprep.subr.mxu0 0.0
  %741 = vmatpush1.msra.mxu0 %v234
  %742 = vmatprep.subr.mxu0 0.0
  %743 = vmatpush1.msra.mxu0 %v235
  %744 = vmatprep.subr.mxu0 0.0
  %745 = vmatpush1.msra.mxu0 %v236
  %746 = vmatprep.subr.mxu0 0.0
  %747 = vmatpush1.msra.mxu0 %v237
  %748 = vmatprep.mubr.f32.mxu0 %v25
  %749 = vmatmul.mubr.f32.gmra.mrb[0].mxu0 %v24
  %v750 = vpop.f32.mrb[0].mxu0
  %v751 = vadd.f32 %v676, %v750
  %v752 = vpop.f32.mrb[0].mxu0
  %753 = vmatprep.mubr.f32.mxu0 %v41
  %754 = vmatmul.mubr.f32.gmra.mrb[0].mxu0 %v40
  %v755 = vpop.f32.mrb[0].mxu0
  %v756 = vadd.f32 %v681, %v755
  %v757 = vpop.f32.mrb[0].mxu0
  %758 = vdwg.mxu0
  %759 = vmatprep.subr.mxu0 0.0
  %760 = vmatpush1.msra.mxu0 %v238
  %761 = vmatprep.subr.mxu0 0.0
  %762 = vmatpush1.msra.mxu0 %v239
  %763 = vmatprep.subr.mxu0 0.0
  %764 = vmatpush1.msra.mxu0 %v240
  %765 = vmatprep.subr.mxu0 0.0
  %766 = vmatpush1.msra.mxu0 %v241
  %767 = vmatprep.subr.mxu0 0.0
  %768 = vmatpush1.msra.mxu0 %v242
  %769 = vmatprep.subr.mxu0 0.0
  %770 = vmatpush1.msra.mxu0 %v243
  %771 = vmatprep.subr.mxu0 0.0
  %772 = vmatpush1.msra.mxu0 %v244
  %773 = vmatprep.subr.mxu0 0.0
  %774 = vmatpush1.msra.mxu0 %v245
  %775 = vmatprep.subr.mxu0 0.0
  %776 = vmatpush1.msra.mxu0 %v246
  %777 = vmatprep.subr.mxu0 0.0
  %778 = vmatpush1.msra.mxu0 %v247
  %779 = vmatprep.subr.mxu0 0.0
  %780 = vmatpush1.msra.mxu0 %v248
  %781 = vmatprep.subr.mxu0 0.0
  %782 = vmatpush1.msra.mxu0 %v249
  %783 = vmatprep.subr.mxu0 0.0
  %784 = vmatpush1.msra.mxu0 %v250
  %785 = vmatprep.subr.mxu0 0.0
  %786 = vmatpush1.msra.mxu0 %v251
  %787 = vmatprep.subr.mxu0 0.0
  %788 = vmatpush1.msra.mxu0 %v252
  %789 = vmatprep.subr.mxu0 0.0
  %790 = vmatpush1.msra.mxu0 %v253
  %791 = vmatprep.subr.mxu0 0.0
  %792 = vmatpush1.msra.mxu0 %v254
  %793 = vmatprep.subr.mxu0 0.0
  %794 = vmatpush1.msra.mxu0 %v255
  %795 = vmatprep.subr.mxu0 0.0
  %796 = vmatpush1.msra.mxu0 %v256
  %797 = vmatprep.subr.mxu0 0.0
  %798 = vmatpush1.msra.mxu0 %v257
  %799 = vmatprep.subr.mxu0 0.0
  %800 = vmatpush1.msra.mxu0 %v258
  %801 = vmatprep.subr.mxu0 0.0
  %802 = vmatpush1.msra.mxu0 %v259
  %803 = vmatprep.subr.mxu0 0.0
  %804 = vmatpush1.msra.mxu0 %v260
  %805 = vmatprep.subr.mxu0 0.0
  %806 = vmatpush1.msra.mxu0 %v261
  %807 = vmatprep.subr.mxu0 0.0
  %808 = vmatpush1.msra.mxu0 %v262
  %809 = vmatprep.subr.mxu0 0.0
  %810 = vmatpush1.msra.mxu0 %v263
  %811 = vmatprep.subr.mxu0 0.0
  %812 = vmatpush1.msra.mxu0 %v264
  %813 = vmatprep.subr.mxu0 0.0
  %814 = vmatpush1.msra.mxu0 %v265
  %815 = vmatprep.subr.mxu0 0.0
  %816 = vmatpush1.msra.mxu0 %v266
  %817 = vmatprep.subr.mxu0 0.0
  %818 = vmatpush1.msra.mxu0 %v267
  %819 = vmatprep.subr.mxu0 0.0
  %820 = vmatpush1.msra.mxu0 %v268
  %821 = vmatprep.subr.mxu0 0.0
  %822 = vmatpush1.msra.mxu0 %v269
  %823 = vmatprep.mubr.f32.mxu0 %v27
  %824 = vmatmul.mubr.f32.gmra.mrb[0].mxu0 %v26
  %v825 = vpop.f32.mrb[0].mxu0
  %v826 = vadd.f32 %v751, %v825
  %v827 = vpop.f32.mrb[0].mxu0
  %828 = vmatprep.mubr.f32.mxu0 %v43
  %829 = vmatmul.mubr.f32.gmra.mrb[0].mxu0 %v42
  %v830 = vpop.f32.mrb[0].mxu0
  %v831 = vadd.f32 %v756, %v830
  %v832 = vpop.f32.mrb[0].mxu0
  %833 = vdwg.mxu0
  %834 = vmatprep.subr.mxu0 0.0
  %835 = vmatpush1.msra.mxu0 %v270
  %836 = vmatprep.subr.mxu0 0.0
  %837 = vmatpush1.msra.mxu0 %v271
  %838 = vmatprep.subr.mxu0 0.0
  %839 = vmatpush1.msra.mxu0 %v272
  %840 = vmatprep.subr.mxu0 0.0
  %841 = vmatpush1.msra.mxu0 %v273
  %842 = vmatprep.subr.mxu0 0.0
  %843 = vmatpush1.msra.mxu0 %v274
  %844 = vmatprep.subr.mxu0 0.0
  %845 = vmatpush1.msra.mxu0 %v275
  %846 = vmatprep.subr.mxu0 0.0
  %847 = vmatpush1.msra.mxu0 %v276
  %848 = vmatprep.subr.mxu0 0.0
  %849 = vmatpush1.msra.mxu0 %v277
  %850 = vmatprep.subr.mxu0 0.0
  %851 = vmatpush1.msra.mxu0 %v278
  %852 = vmatprep.subr.mxu0 0.0
  %853 = vmatpush1.msra.mxu0 %v279
  %854 = vmatprep.subr.mxu0 0.0
  %855 = vmatpush1.msra.mxu0 %v280
  %856 = vmatprep.subr.mxu0 0.0
  %857 = vmatpush1.msra.mxu0 %v281
  %858 = vmatprep.subr.mxu0 0.0
  %859 = vmatpush1.msra.mxu0 %v282
  %860 = vmatprep.subr.mxu0 0.0
  %861 = vmatpush1.msra.mxu0 %v283
  %862 = vmatprep.subr.mxu0 0.0
  %863 = vmatpush1.msra.mxu0 %v284
  %864 = vmatprep.subr.mxu0 0.0
  %865 = vmatpush1.msra.mxu0 %v285
  %866 = vmatprep.subr.mxu0 0.0
  %867 = vmatpush1.msra.mxu0 %v286
  %868 = vmatprep.subr.mxu0 0.0
  %869 = vmatpush1.msra.mxu0 %v287
  %870 = vmatprep.subr.mxu0 0.0
  %871 = vmatpush1.msra.mxu0 %v288
  %872 = vmatprep.subr.mxu0 0.0
  %873 = vmatpush1.msra.mxu0 %v289
  %874 = vmatprep.subr.mxu0 0.0
  %875 = vmatpush1.msra.mxu0 %v290
  %876 = vmatprep.subr.mxu0 0.0
  %877 = vmatpush1.msra.mxu0 %v291
  %878 = vmatprep.subr.mxu0 0.0
  %879 = vmatpush1.msra.mxu0 %v292
  %880 = vmatprep.subr.mxu0 0.0
  %881 = vmatpush1.msra.mxu0 %v293
  %882 = vmatprep.subr.mxu0 0.0
  %883 = vmatpush1.msra.mxu0 %v294
  %884 = vmatprep.subr.mxu0 0.0
  %885 = vmatpush1.msra.mxu0 %v295
  %886 = vmatprep.subr.mxu0 0.0
  %887 = vmatpush1.msra.mxu0 %v296
  %888 = vmatprep.subr.mxu0 0.0
  %889 = vmatpush1.msra.mxu0 %v297
  %890 = vmatprep.subr.mxu0 0.0
  %891 = vmatpush1.msra.mxu0 %v298
  %892 = vmatprep.subr.mxu0 0.0
  %893 = vmatpush1.msra.mxu0 %v299
  %894 = vmatprep.subr.mxu0 0.0
  %895 = vmatpush1.msra.mxu0 %v300
  %896 = vmatprep.subr.mxu0 0.0
  %897 = vmatpush1.msra.mxu0 %v301
  %898 = vmatprep.mubr.f32.mxu0 %v29
  %899 = vmatmul.mubr.f32.gmra.mrb[0].mxu0 %v28
  %v900 = vpop.f32.mrb[0].mxu0
  %v901 = vadd.f32 %v826, %v900
  %v902 = vpop.f32.mrb[0].mxu0
  %903 = vmatprep.mubr.f32.mxu0 %v45
  %904 = vmatmul.mubr.f32.gmra.mrb[0].mxu0 %v44
  %v905 = vpop.f32.mrb[0].mxu0
  %v906 = vadd.f32 %v831, %v905
  %v907 = vpop.f32.mrb[0].mxu0
  %908 = vdwg.mxu0
  %909 = vst [vmem:[%s3] sm:$0xff] %v901
  %910 = vst [vmem:[%s3 + $0x8] sm:$0xff] %v906
  // Predicated region
  $region14: #{cnn_lstm_state_forward.4} parent=0 // pred_check
    _
  $region15: #{cnn_lstm_state_forward.4} parent=0 // pred_check_branch
    %912 = sbr.rel (0) target = $region17
  $region16: #{cnn_lstm_state_forward.4} parent=0 // pred_region
    _
  $region17: #{cnn_lstm_state_forward.4} parent=0 // pred_fallthru
    _
  // Predicated region
  $region18: #{cnn_lstm_state_forward.4} parent=0 // pred_check
    _
  $region19: #{cnn_lstm_state_forward.4} parent=0 // pred_check_branch
    %914 = sbr.rel (0) target = $region21
  $region20: #{cnn_lstm_state_forward.4} parent=0 // pred_region
    _
  $region21: #{cnn_lstm_state_forward.4} parent=0 // pred_fallthru
    _

// kernel: cnn_lstm_state_forward.5
$region0: #{cnn_lstm_state_forward.5}
  #allocation0 [shape = 'u32[]', space=smem, size = 0x4, offset = 0x4, fixed_abs, tag = 'smem constant byte address 0x4 - core index']
  #allocation1 [shape = 'u32[144,128]{1,0:T(1,128)}', space=vmem, size = 0x12000, scoped, tag = 'internal scratch']
  #allocation2 [shape = 'f32[2,32]{1,0:T(2,128)}', space=vmem, size = 0x400, scoped, tag = 'scratch operand']
  #allocation3 [shape = 'f32[2,32]{1,0:T(2,128)}', space=vmem, size = 0x400, scoped, tag = 'scratch operand']
  %s0 = inlined_call_operand.vmem [shape: f32[8,2,128], index: 0, kind: input, shape index: {}]
  %s1 = inlined_call_operand.vmem [shape: f32[32,128], index: 1, kind: input, shape index: {}]
  %s2 = inlined_call_operand.vmem [shape: f32[32,10], index: 2, kind: input, shape index: {}]
  %s3 = inlined_call_operand.vmem [shape: f32[1,10], index: 3, kind: input, shape index: {}]
  %s4 = inlined_call_operand.hbm [shape: f32[2,10], index: 4, kind: output, shape index: {0}]
  %s5 = inlined_call_operand.hbm [shape: f32[2,32], index: 5, kind: output, shape index: {1}]
  %s6 = inlined_call_operand.hbm [shape: f32[2,32], index: 6, kind: output, shape index: {2}]
  %7 = xla_tuple %s4, %s5, %s6
  %s8 = sld [smem:[#allocation0]]
  $region73: #{cnn_lstm_state_forward.5} parent=0
    _
  %s10 = ssub.s32 1, %s8
  %s11 = scalar_select 0, %s10, %s8
  $region1: #{cnn_lstm_state_forward.5} parent=0
    #allocation4 [shape = 'u8[1024]{0}', space=vmem, size = 0x400, scoped, tag = 'output window, operand 0, single buffered']
    #allocation5 [shape = 's32[2]{0}', space=sflag, size = 0x8, scoped, tag = 'scoped memory for cnn_lstm_state_forward.5']
    #allocation6 [shape = 'u8[1024]{0}', space=vmem, size = 0x400, scoped, tag = 'output window, operand 1, single buffered']
    #allocation7 [shape = 's32[1]{0}', space=sflag, size = 0x4, scoped, tag = 'scoped memory for cnn_lstm_state_forward.5']
    #allocation8 [shape = 'u8[1024]{0}', space=vmem, size = 0x400, scoped, tag = 'output window, operand 2, single buffered']
    %12 = vsyncpa [#allocation5], 0
    %13 = vsyncpa [#allocation7], 0
    loop: start=0, step=1, limit=10
    $region2: #{cnn_lstm_state_forward.5} parent=1 // loop_pre_header
      _
    $region3: #{cnn_lstm_state_forward.5} parent=1 // loop_header
      %s15 = sphi 0, %s19
      %p16 = scmp.ge.s32.totalorder %s15, 10
      %s25 = sphi 0, %s27
      %s28 = sphi 0, %s25
      %s29 = sphi 0, %s28
      %s45 = sphi 0, %s29
      %s49 = sphi 0, %s49
      %s51 = sphi 0, %s49
      %s52 = sphi 0, %s51
      %s66 = sphi 0, %s52
      %s70 = sphi 0, %s70
      %s72 = sphi 0, %s70
      %s73 = sphi 0, %s72
      %s87 = sphi 0, %s73
      %s91 = sphi 0, %s91
      %s93 = sphi 0, %s91
      %s94 = sphi 0, %s93
      %s108 = sphi 0, %s94
      %s112 = sphi 0, %s112
      %s114 = sphi 0, %s112
      %s115 = sphi 0, %s114
      %s129 = sphi 0, %s115
      %s133 = sphi 0, %s133
      %s135 = sphi 0, %s133
      %s136 = sphi 0, %s135
      %s150 = sphi 0, %s136
      %s154 = sphi 0, %s154
      %s156 = sphi 0, %s154
      %s157 = sphi 0, %s156
      %s171 = sphi 0, %s157
    $region4: #{cnn_lstm_state_forward.5} parent=1 // loop_header_branch
      %18 = sbr.rel (%p16) target = $region8
    $region5: #{cnn_lstm_state_forward.5} parent=1 // loop_body
      %s20 = ssub.s32 %s15, 1
      %s21 = ssub.s32 %s15, 2
      %s22 = sadd.s32 %s15, 1
      %s23 = ssub.s32 %s15, %s22
      %p24 = scmp.eq.s32.totalorder %s23, 0
      %s26 = sadd.s32 %s25, 1
      %s27 = scalar_select %p24, %s25, %s26
      %p30 = pneg %p24
      %p31 = scmp.eq.s32.totalorder %s15, 7
      %p32 = por %p30, %p31
      %p33 = scmp.ne.s32.totalorder %s25, %s28
      %p34 = scmp.eq.s32.totalorder %s15, 0
      %p35 = por %p33, %p34
      %p36 = scmp.ne.s32.totalorder %s25, %s28
      %p37 = scmp.eq.s32.totalorder %s20, 7
      %p38 = por %p36, %p37
      %p39 = scmp.ne.s32.totalorder %s28, %s29
      %p40 = scmp.eq.s32.totalorder %s20, 0
      %p41 = por %p39, %p40
      %p42 = scmp.ne.s32.totalorder %s28, %s29
      %p43 = scmp.eq.s32.totalorder %s21, 7
      %p44 = por %p42, %p43
      %p46 = scmp.ne.s32.totalorder %s29, %s45
      %p47 = scmp.eq.s32.totalorder %s21, 0
      %p48 = por %p46, %p47
      %s50 = sadd.s32 %s49, 1
      %p53 = scmp.eq.s32.totalorder %s15, 7
      %p54 = scmp.ne.s32.totalorder %s49, %s51
      %p55 = scmp.eq.s32.totalorder %s15, 0
      %p56 = por %p54, %p55
      %p57 = scmp.ne.s32.totalorder %s49, %s51
      %p58 = scmp.eq.s32.totalorder %s20, 7
      %p59 = por %p57, %p58
      %p60 = scmp.ne.s32.totalorder %s51, %s52
      %p61 = scmp.eq.s32.totalorder %s20, 0
      %p62 = por %p60, %p61
      %p63 = scmp.ne.s32.totalorder %s51, %s52
      %p64 = scmp.eq.s32.totalorder %s21, 7
      %p65 = por %p63, %p64
      %p67 = scmp.ne.s32.totalorder %s52, %s66
      %p68 = scmp.eq.s32.totalorder %s21, 0
      %p69 = por %p67, %p68
      %s71 = sadd.s32 %s70, 1
      %p74 = scmp.eq.s32.totalorder %s15, 7
      %p75 = scmp.ne.s32.totalorder %s70, %s72
      %p76 = scmp.eq.s32.totalorder %s15, 0
      %p77 = por %p75, %p76
      %p78 = scmp.ne.s32.totalorder %s70, %s72
      %p79 = scmp.eq.s32.totalorder %s20, 7
      %p80 = por %p78, %p79
      %p81 = scmp.ne.s32.totalorder %s72, %s73
      %p82 = scmp.eq.s32.totalorder %s20, 0
      %p83 = por %p81, %p82
      %p84 = scmp.ne.s32.totalorder %s72, %s73
      %p85 = scmp.eq.s32.totalorder %s21, 7
      %p86 = por %p84, %p85
      %p88 = scmp.ne.s32.totalorder %s73, %s87
      %p89 = scmp.eq.s32.totalorder %s21, 0
      %p90 = por %p88, %p89
      %s92 = sadd.s32 %s91, 1
      %p95 = scmp.eq.s32.totalorder %s15, 7
      %p96 = scmp.ne.s32.totalorder %s91, %s93
      %p97 = scmp.eq.s32.totalorder %s15, 0
      %p98 = por %p96, %p97
      %p99 = scmp.ne.s32.totalorder %s91, %s93
      %p100 = scmp.eq.s32.totalorder %s20, 7
      %p101 = por %p99, %p100
      %p102 = scmp.ne.s32.totalorder %s93, %s94
      %p103 = scmp.eq.s32.totalorder %s20, 0
      %p104 = por %p102, %p103
      %p105 = scmp.ne.s32.totalorder %s93, %s94
      %p106 = scmp.eq.s32.totalorder %s21, 7
      %p107 = por %p105, %p106
      %p109 = scmp.ne.s32.totalorder %s94, %s108
      %p110 = scmp.eq.s32.totalorder %s21, 0
      %p111 = por %p109, %p110
      %s113 = sadd.s32 %s112, 1
      %p116 = scmp.eq.s32.totalorder %s15, 7
      %p117 = scmp.ne.s32.totalorder %s112, %s114
      %p118 = scmp.eq.s32.totalorder %s15, 0
      %p119 = por %p117, %p118
      %p120 = scmp.ne.s32.totalorder %s112, %s114
      %p121 = scmp.eq.s32.totalorder %s20, 7
      %p122 = por %p120, %p121
      %p123 = scmp.ne.s32.totalorder %s114, %s115
      %p124 = scmp.eq.s32.totalorder %s20, 0
      %p125 = por %p123, %p124
      %p126 = scmp.ne.s32.totalorder %s114, %s115
      %p127 = scmp.eq.s32.totalorder %s21, 7
      %p128 = por %p126, %p127
      %p130 = scmp.ne.s32.totalorder %s115, %s129
      %p131 = scmp.eq.s32.totalorder %s21, 0
      %p132 = por %p130, %p131
      %s134 = sadd.s32 %s133, 1
      %p137 = scmp.eq.s32.totalorder %s15, 7
      %p138 = scmp.ne.s32.totalorder %s133, %s135
      %p139 = scmp.eq.s32.totalorder %s15, 0
      %p140 = por %p138, %p139
      %p141 = scmp.ne.s32.totalorder %s133, %s135
      %p142 = scmp.eq.s32.totalorder %s20, 7
      %p143 = por %p141, %p142
      %p144 = scmp.ne.s32.totalorder %s135, %s136
      %p145 = scmp.eq.s32.totalorder %s20, 0
      %p146 = por %p144, %p145
      %p147 = scmp.ne.s32.totalorder %s135, %s136
      %p148 = scmp.eq.s32.totalorder %s21, 7
      %p149 = por %p147, %p148
      %p151 = scmp.ne.s32.totalorder %s136, %s150
      %p152 = scmp.eq.s32.totalorder %s21, 0
      %p153 = por %p151, %p152
      %s155 = sadd.s32 %s154, 1
      %p158 = scmp.eq.s32.totalorder %s15, 7
      %p159 = scmp.ne.s32.totalorder %s154, %s156
      %p160 = scmp.eq.s32.totalorder %s15, 0
      %p161 = por %p159, %p160
      %p162 = scmp.ne.s32.totalorder %s154, %s156
      %p163 = scmp.eq.s32.totalorder %s20, 7
      %p164 = por %p162, %p163
      %p165 = scmp.ne.s32.totalorder %s156, %s157
      %p166 = scmp.eq.s32.totalorder %s20, 0
      %p167 = por %p165, %p166
      %p168 = scmp.ne.s32.totalorder %s156, %s157
      %p169 = scmp.eq.s32.totalorder %s21, 7
      %p170 = por %p168, %p169
      %p172 = scmp.ne.s32.totalorder %s157, %s171
      %p173 = scmp.eq.s32.totalorder %s21, 0
      %p174 = por %p172, %p173
      %p175 = scmp.le.s32.totalorder 1, %s15
      %p176 = scmp.lt.s32.totalorder %s15, 9
      %p177 = pnand %p175, %p176
      %p178 = pneg %p177
      // Predicated region
      $region9: #{cnn_lstm_state_forward.5} parent=5 // pred_check
        _
      $region10: #{cnn_lstm_state_forward.5} parent=5 // pred_check_branch
        %180 = sbr.rel (%p177) target = $region12
      $region11: #{cnn_lstm_state_forward.5} parent=5 // pred_region
        %s181 = ssub.s32 %s15, 1
        // Predicated region
        $region13: #{cnn_lstm_state_forward.5} parent=11 // pred_check
          %p182 = pneg %p62
        $region14: #{cnn_lstm_state_forward.5} parent=11 // pred_check_branch
          %184 = sbr.rel (%p182) target = $region16
        $region15: #{cnn_lstm_state_forward.5} parent=11 // pred_region
          _
        $region16: #{cnn_lstm_state_forward.5} parent=11 // pred_fallthru
          _
        // Predicated region
        $region17: #{cnn_lstm_state_forward.5} parent=11 // pred_check
          %p185 = pneg %p83
        $region18: #{cnn_lstm_state_forward.5} parent=11 // pred_check_branch
          %187 = sbr.rel (%p185) target = $region20
        $region19: #{cnn_lstm_state_forward.5} parent=11 // pred_region
          _
        $region20: #{cnn_lstm_state_forward.5} parent=11 // pred_fallthru
          _
        // Predicated region
        $region21: #{cnn_lstm_state_forward.5} parent=11 // pred_check
          %p188 = pneg %p104
        $region22: #{cnn_lstm_state_forward.5} parent=11 // pred_check_branch
          %190 = sbr.rel (%p188) target = $region24
        $region23: #{cnn_lstm_state_forward.5} parent=11 // pred_region
          _
        $region24: #{cnn_lstm_state_forward.5} parent=11 // pred_fallthru
          _
      $region12: #{cnn_lstm_state_forward.5} parent=5 // pred_fallthru
        _
      %p191 = scmp.lt.s32.totalorder %s15, 8
      // Predicated region
      $region25: #{cnn_lstm_state_forward.5} parent=5 // pred_check
        %p192 = pneg %p191
      $region26: #{cnn_lstm_state_forward.5} parent=5 // pred_check_branch
        %194 = sbr.rel (%p192) target = $region28
      $region27: #{cnn_lstm_state_forward.5} parent=5 // pred_region
        // Predicated region
        $region29: #{cnn_lstm_state_forward.5} parent=27 // pred_check
          %p195 = pneg %p35
        $region30: #{cnn_lstm_state_forward.5} parent=27 // pred_check_branch
          %197 = sbr.rel (%p195) target = $region32
        $region31: #{cnn_lstm_state_forward.5} parent=27 // pred_region
          %p198 = scmp.lt.s32.totalorder %s15, 7
          %s199 = scalar_select %p198, %s15, 7
          %s200 = smul.addr %s199, 2
          %s201 = scalar_lea.vmem %s0, %s200
        $region32: #{cnn_lstm_state_forward.5} parent=27 // pred_fallthru
          _
      $region28: #{cnn_lstm_state_forward.5} parent=5 // pred_fallthru
        _
      %p202 = scmp.le.s32.totalorder 1, %s15
      %p203 = scmp.lt.s32.totalorder %s15, 9
      %p204 = pnand %p202, %p203
      %p205 = pneg %p204
      // Predicated region
      $region33: #{cnn_lstm_state_forward.5} parent=5 // pred_check
        _
      $region34: #{cnn_lstm_state_forward.5} parent=5 // pred_check_branch
        %207 = sbr.rel (%p204) target = $region36
      $region35: #{cnn_lstm_state_forward.5} parent=5 // pred_region
        %s208 = ssub.s32 %s15, 1
        %p209 = scmp.lt.s32.totalorder %s20, 7
        %s210 = scalar_select %p209, %s20, 7
        %s211 = smul.addr %s210, 2
        %s212 = scalar_lea.vmem %s0, %s211
        %p213 = pneg %p41
        %p214 = pneg %p38
        %p215 = pneg %p62
        %p216 = pneg %p59
        %p217 = pneg %p83
        %p218 = pneg %p80
        %p219 = pneg %p104
        %p220 = pneg %p101
        %p221 = pneg %p125
        %p222 = pneg %p122
        %p223 = pneg %p146
        %p224 = pneg %p143
        %p225 = pneg %p167
        %p226 = pneg %p164
        %p227 = scmp.lt.s32.totalorder %s20, 7
        %s228 = scalar_select %p227, %s20, 7
        %s229 = smul.addr %s228, 2
        %s230 = scalar_lea.vmem %s0, %s229
        %p231 = scmp.eq.s32.totalorder %s20, 0
        // Predicated region
        $region37: #{cnn_lstm_state_forward.5} parent=35 // pred_check
          %p232 = pneg %p231
        $region38: #{cnn_lstm_state_forward.5} parent=35 // pred_check_branch
          %234 = sbr.rel (%p232) target = $region40
        $region39: #{cnn_lstm_state_forward.5} parent=35 // pred_region
          %vm235 = vcmask 254976
          %236 = vst.msk [vmem:[#allocation2] sm:$0x3] %vm235, 0.0
          %237 = vst.msk [vmem:[#allocation3] sm:$0x3] %vm235, 0.0
        $region40: #{cnn_lstm_state_forward.5} parent=35 // pred_fallthru
          _
        %v238 = vld [vmem:[#allocation2] sm:$0x3]
        %v239 = vld [vmem:[#allocation3] sm:$0x3]
        %v240 = vld [vmem:[%s230] sm:$0x3]
        %v241 = vld [vmem:[%s1] sm:$0xff]
        %v242 = vld [vmem:[%s1 + $0x8] sm:$0xff]
        %v243 = vld [vmem:[%s1 + $0x10] sm:$0xff]
        %v244 = vld [vmem:[%s1 + $0x18] sm:$0xff]
        %vm245 = vcmask 261120
        %v247 = vsel %vm245, %v238, 0
        %249 = vmatprep.subr.mxu0 0.0
        %250 = vmatpush1.msra.mxu0 %v241
        %251 = vmatprep.subr.mxu0 0.0
        %252 = vmatpush1.msra.mxu0 %v242
        %253 = vmatprep.subr.mxu0 0.0
        %254 = vmatpush1.msra.mxu0 %v243
        %255 = vmatprep.subr.mxu0 0.0
        %256 = vmatpush1.msra.mxu0 %v244
        %257 = vmatprep.subr.mxu0 0.0
        %258 = vmatpush1.msra.mxu0 0.0
        %259 = vmatprep.subr.mxu0 0.0
        %260 = vmatpush1.msra.mxu0 0.0
        %261 = vmatprep.subr.mxu0 0.0
        %262 = vmatpush1.msra.mxu0 0.0
        %263 = vmatprep.subr.mxu0 0.0
        %264 = vmatpush1.msra.mxu0 0.0
        %265 = vmatprep.subr.mxu0 0.0
        %266 = vmatpush1.msra.mxu0 0.0
        %267 = vmatprep.subr.mxu0 0.0
        %268 = vmatpush1.msra.mxu0 0.0
        %269 = vmatprep.subr.mxu0 0.0
        %270 = vmatpush1.msra.mxu0 0.0
        %271 = vmatprep.subr.mxu0 0.0
        %272 = vmatpush1.msra.mxu0 0.0
        %273 = vmatprep.subr.mxu0 0.0
        %274 = vmatpush1.msra.mxu0 0.0
        %275 = vmatprep.subr.mxu0 0.0
        %276 = vmatpush1.msra.mxu0 0.0
        %277 = vmatprep.subr.mxu0 0.0
        %278 = vmatpush1.msra.mxu0 0.0
        %279 = vmatprep.subr.mxu0 0.0
        %280 = vmatpush1.msra.mxu0 0.0
        %281 = vmatprep.subr.mxu0 0.0
        %282 = vmatpush1.msra.mxu0 0.0
        %283 = vmatprep.subr.mxu0 0.0
        %284 = vmatpush1.msra.mxu0 0.0
        %285 = vmatprep.subr.mxu0 0.0
        %286 = vmatpush1.msra.mxu0 0.0
        %287 = vmatprep.subr.mxu0 0.0
        %288 = vmatpush1.msra.mxu0 0.0
        %289 = vmatprep.subr.mxu0 0.0
        %290 = vmatpush1.msra.mxu0 0.0
        %291 = vmatprep.subr.mxu0 0.0
        %292 = vmatpush1.msra.mxu0 0.0
        %293 = vmatprep.subr.mxu0 0.0
        %294 = vmatpush1.msra.mxu0 0.0
        %295 = vmatprep.subr.mxu0 0.0
        %296 = vmatpush1.msra.mxu0 0.0
        %297 = vmatprep.subr.mxu0 0.0
        %298 = vmatpush1.msra.mxu0 0.0
        %299 = vmatprep.subr.mxu0 0.0
        %300 = vmatpush1.msra.mxu0 0.0
        %301 = vmatprep.subr.mxu0 0.0
        %302 = vmatpush1.msra.mxu0 0.0
        %303 = vmatprep.subr.mxu0 0.0
        %304 = vmatpush1.msra.mxu0 0.0
        %305 = vmatprep.subr.mxu0 0.0
        %306 = vmatpush1.msra.mxu0 0.0
        %307 = vmatprep.subr.mxu0 0.0
        %308 = vmatpush1.msra.mxu0 0.0
        %309 = vmatprep.subr.mxu0 0.0
        %310 = vmatpush1.msra.mxu0 0.0
        %311 = vmatprep.subr.mxu0 0.0
        %312 = vmatpush1.msra.mxu0 0.0
        %313 = vmatprep.mubr.f32.mxu0 0.0
        %314 = vmatmul.mubr.f32.gmra.mrb[0].mxu0 %v247
        %v315 = vpop.f32.mrb[0].mxu0
        %v316 = vadd.f32 0.0, %v315
        %v317 = vpop.f32.mrb[0].mxu0
        %318 = vdwg.mxu0
        %v319 = vadd.f32 %v240, %v316
        %v320 = vxor.u32 %v319, 2147483648
        %v321 = vmul.f32 %v320, 1.442695
        %v322 = vpow.pop %v321
        %v323 = vadd.f32 %v322, 1.0
        %v324 = vrcp.pop %v323
        %v325 = vmul.f32 1.0, %v324
        %v326 = vtanh.pop %v319
        %328 = vrot.lane.b32.xlu0 %v239, 32
        %v329 = vpop.permute.xlu0 %328
        %v331 = vmul.f32 %v325, %v329
        %333 = vrot.lane.b32.xlu0 %v326, 64
        %v334 = vpop.permute.xlu0 %333
        %v336 = vmul.f32 %v325, %v334
        %338 = vrot.lane.b32.xlu0 %v336, 32
        %v339 = vpop.permute.xlu0 %338
        %v341 = vadd.f32 %v331, %v339
        %v342 = vtanh.pop %v341
        %344 = vrot.lane.b32.xlu0 %v342, 64
        %v345 = vpop.permute.xlu0 %344
        %v347 = vmul.f32 %v325, %v345
        %349 = vrot.lane.b32.xlu0 %v347, 32
        %v350 = vpop.permute.xlu0 %349
        %vm352 = vcmask 254976
        %353 = vst.msk [vmem:[#allocation2] sm:$0x3] %vm352, %v350
        %355 = vrot.lane.b32.xlu0 %v341, 96
        %v356 = vpop.permute.xlu0 %355
        %358 = vst.msk [vmem:[#allocation3] sm:$0x3] %vm352, %v356
        %p359 = scmp.eq.s32.totalorder %s20, 7
        // Predicated region
        $region41: #{cnn_lstm_state_forward.5} parent=35 // pred_check
          %p360 = pneg %p359
        $region42: #{cnn_lstm_state_forward.5} parent=35 // pred_check_branch
          %362 = sbr.rel (%p360) target = $region44
        $region43: #{cnn_lstm_state_forward.5} parent=35 // pred_region
          %363 = vst.msk [vmem:[#allocation6] sm:$0x3] %vm352, %v350
          %364 = vst.msk [vmem:[#allocation8] sm:$0x3] %vm352, %v356
          %v365 = vld [vmem:[%s2] sm:$0xff]
          %v366 = vld [vmem:[%s2 + $0x8] sm:$0xff]
          %v367 = vld [vmem:[%s2 + $0x10] sm:$0xff]
          %v368 = vld [vmem:[%s2 + $0x18] sm:$0xff]
          %v369 = vld [vmem:[%s3] sm:$0x1]
          %v371 = vlaneseq
          %v372 = vshrl.u32 %v371, 7
          %v373 = vsub.s32 0, %v372
          %v374 = vrot.slane %v369, %v373
          %v376 = vsel %vm245, %v350, 0
          %378 = vmatprep.subr.mxu0 0.0
          %379 = vmatpush1.msra.mxu0 %v365
          %380 = vmatprep.subr.mxu0 0.0
          %381 = vmatpush1.msra.mxu0 %v366
          %382 = vmatprep.subr.mxu0 0.0
          %383 = vmatpush1.msra.mxu0 %v367
          %384 = vmatprep.subr.mxu0 0.0
          %385 = vmatpush1.msra.mxu0 %v368
          %386 = vmatprep.subr.mxu0 0.0
          %387 = vmatpush1.msra.mxu0 0.0
          %388 = vmatprep.subr.mxu0 0.0
          %389 = vmatpush1.msra.mxu0 0.0
          %390 = vmatprep.subr.mxu0 0.0
          %391 = vmatpush1.msra.mxu0 0.0
          %392 = vmatprep.subr.mxu0 0.0
          %393 = vmatpush1.msra.mxu0 0.0
          %394 = vmatprep.subr.mxu0 0.0
          %395 = vmatpush1.msra.mxu0 0.0
          %396 = vmatprep.subr.mxu0 0.0
          %397 = vmatpush1.msra.mxu0 0.0
          %398 = vmatprep.subr.mxu0 0.0
          %399 = vmatpush1.msra.mxu0 0.0
          %400 = vmatprep.subr.mxu0 0.0
          %401 = vmatpush1.msra.mxu0 0.0
          %402 = vmatprep.subr.mxu0 0.0
          %403 = vmatpush1.msra.mxu0 0.0
          %404 = vmatprep.subr.mxu0 0.0
          %405 = vmatpush1.msra.mxu0 0.0
          %406 = vmatprep.subr.mxu0 0.0
          %407 = vmatpush1.msra.mxu0 0.0
          %408 = vmatprep.subr.mxu0 0.0
          %409 = vmatpush1.msra.mxu0 0.0
          %410 = vmatprep.subr.mxu0 0.0
          %411 = vmatpush1.msra.mxu0 0.0
          %412 = vmatprep.subr.mxu0 0.0
          %413 = vmatpush1.msra.mxu0 0.0
          %414 = vmatprep.subr.mxu0 0.0
          %415 = vmatpush1.msra.mxu0 0.0
          %416 = vmatprep.subr.mxu0 0.0
          %417 = vmatpush1.msra.mxu0 0.0
          %418 = vmatprep.subr.mxu0 0.0
          %419 = vmatpush1.msra.mxu0 0.0
          %420 = vmatprep.subr.mxu0 0.0
          %421 = vmatpush1.msra.mxu0 0.0
          %422 = vmatprep.subr.mxu0 0.0
          %423 = vmatpush1.msra.mxu0 0.0
          %424 = vmatprep.subr.mxu0 0.0
          %425 = vmatpush1.msra.mxu0 0.0
          %426 = vmatprep.subr.mxu0 0.0
          %427 = vmatpush1.msra.mxu0 0.0
          %428 = vmatprep.subr.mxu0 0.0
          %429 = vmatpush1.msra.mxu0 0.0
          %430 = vmatprep.subr.mxu0 0.0
          %431 = vmatpush1.msra.mxu0 0.0
          %432 = vmatprep.subr.mxu0 0.0
          %433 = vmatpush1.msra.mxu0 0.0
          %434 = vmatprep.subr.mxu0 0.0
          %435 = vmatpush1.msra.mxu0 0.0
          %436 = vmatprep.subr.mxu0 0.0
          %437 = vmatpush1.msra.mxu0 0.0
          %438 = vmatprep.subr.mxu0 0.0
          %439 = vmatpush1.msra.mxu0 0.0
          %440 = vmatprep.subr.mxu0 0.0
          %441 = vmatpush1.msra.mxu0 0.0
          %442 = vmatprep.mubr.f32.mxu0 0.0
          %443 = vmatmul.mubr.f32.gmra.mrb[0].mxu0 %v376
          %v444 = vpop.f32.mrb[0].mxu0
          %v445 = vadd.f32 %v374, %v444
          %v446 = vpop.f32.mrb[0].mxu0
          %447 = vdwg.mxu0
          %vm448 = vcmask 74752
          %449 = vst.msk [vmem:[#allocation4] sm:$0x3] %vm448, %v445
        $region44: #{cnn_lstm_state_forward.5} parent=35 // pred_fallthru
          _
        // Predicated region
        $region45: #{cnn_lstm_state_forward.5} parent=35 // pred_check
          %p450 = pneg %p122
        $region46: #{cnn_lstm_state_forward.5} parent=35 // pred_check_branch
          %452 = sbr.rel (%p450) target = $region48
        $region47: #{cnn_lstm_state_forward.5} parent=35 // pred_region
          %s454 = ssub.s32 32, 32
          %455 = vsyncadd [#allocation5], %s454
          %s457 = sshll.u32 [#allocation4], 4
          %s458 = int_to_ptr.vmem [resolvable:$true] %s457
          %460 = dma.vmem_to_hbm [thread:$0]  %s458, 32, %s4, [#allocation5]
        $region48: #{cnn_lstm_state_forward.5} parent=35 // pred_fallthru
          _
        // Predicated region
        $region49: #{cnn_lstm_state_forward.5} parent=35 // pred_check
          %p461 = pneg %p143
        $region50: #{cnn_lstm_state_forward.5} parent=35 // pred_check_branch
          %463 = sbr.rel (%p461) target = $region52
        $region51: #{cnn_lstm_state_forward.5} parent=35 // pred_region
          %s465 = ssub.s32 32, 32
          %466 = vsyncadd [#allocation7], %s465
          %s468 = sshll.u32 [#allocation6], 4
          %s469 = int_to_ptr.vmem [resolvable:$true] %s468
          %471 = dma.vmem_to_hbm [thread:$0]  %s469, 32, %s5, [#allocation7]
        $region52: #{cnn_lstm_state_forward.5} parent=35 // pred_fallthru
          _
        // Predicated region
        $region53: #{cnn_lstm_state_forward.5} parent=35 // pred_check
          %p472 = pneg %p164
        $region54: #{cnn_lstm_state_forward.5} parent=35 // pred_check_branch
          %474 = sbr.rel (%p472) target = $region56
        $region55: #{cnn_lstm_state_forward.5} parent=35 // pred_region
          %s476 = ssub.s32 32, 32
          %477 = vsyncadd [#allocation7], %s476
          %s479 = sshll.u32 [#allocation8], 4
          %s480 = int_to_ptr.vmem [resolvable:$true] %s479
          %482 = dma.vmem_to_hbm [thread:$0]  %s480, 32, %s6, [#allocation7]
        $region56: #{cnn_lstm_state_forward.5} parent=35 // pred_fallthru
          _
        // Predicated region
        $region57: #{cnn_lstm_state_forward.5} parent=35 // pred_check
          %p483 = pneg %p122
        $region58: #{cnn_lstm_state_forward.5} parent=35 // pred_check_branch
          %485 = sbr.rel (%p483) target = $region60
        $region59: #{cnn_lstm_state_forward.5} parent=35 // pred_region
          %486 = dma.done [#allocation5], 32
        $region60: #{cnn_lstm_state_forward.5} parent=35 // pred_fallthru
          _
        // Predicated region
        $region61: #{cnn_lstm_state_forward.5} parent=35 // pred_check
          %p487 = pneg %p143
        $region62: #{cnn_lstm_state_forward.5} parent=35 // pred_check_branch
          %489 = sbr.rel (%p487) target = $region64
        $region63: #{cnn_lstm_state_forward.5} parent=35 // pred_region
          %490 = dma.done [#allocation7], 32
        $region64: #{cnn_lstm_state_forward.5} parent=35 // pred_fallthru
          _
        // Predicated region
        $region65: #{cnn_lstm_state_forward.5} parent=35 // pred_check
          %p491 = pneg %p164
        $region66: #{cnn_lstm_state_forward.5} parent=35 // pred_check_branch
          %493 = sbr.rel (%p491) target = $region68
        $region67: #{cnn_lstm_state_forward.5} parent=35 // pred_region
          %494 = dma.done [#allocation7], 32
        $region68: #{cnn_lstm_state_forward.5} parent=35 // pred_fallthru
          _
      $region36: #{cnn_lstm_state_forward.5} parent=5 // pred_fallthru
        _
      %p495 = scmp.le.s32.totalorder 2, %s15
      // Predicated region
      $region69: #{cnn_lstm_state_forward.5} parent=5 // pred_check
        %p496 = pneg %p495
      $region70: #{cnn_lstm_state_forward.5} parent=5 // pred_check_branch
        %498 = sbr.rel (%p496) target = $region72
      $region71: #{cnn_lstm_state_forward.5} parent=5 // pred_region
        %s499 = ssub.s32 %s15, 2
      $region72: #{cnn_lstm_state_forward.5} parent=5 // pred_fallthru
        _
    $region6: #{cnn_lstm_state_forward.5} parent=1 // loop_footer
      %s19 = sadd.s32 1, %s15
    $region7: #{cnn_lstm_state_forward.5} parent=1 // loop_footer_branch
      %14 = sbr.rel target = $region3
    $region8: #{cnn_lstm_state_forward.5} parent=1 // loop_exit
      _
    %500 = vsyncpa [#allocation5], 1
    %s501 = scalar_lea.sflag [#allocation5], 1
    %502 = vsyncpa %s501, 1
    %503 = vsyncpa [#allocation7], 1

</llo_original>
